<compile_context>
chip_gen: v7x
topology: tpu7x:2x2x1
jax: 0.10.0
libtpu: 0.0.40
codegen_flags: <defaults>
</compile_context>

<pallas_src>
import math
import functools

import jax
import jax.numpy as jnp
from jax.experimental import pallas as pl
from jax.experimental.pallas import tpu as pltpu


# ---------------------------------------------------------------------------
# Model dims (small, deterministic)
# ---------------------------------------------------------------------------
B = 2          # batch
S = 8          # sequence length
D = 32         # d_model
H = 4          # num_heads
HD = D // H    # head dim
DFF = 64       # d_ff
LN_EPS = 1e-5
NEG_INF = -1e9


def _dot_t(a, b):
    """a (M, K) contracted with b (N, K) over K  ==  a @ b.T  -> (M, N)."""
    return jax.lax.dot_general(a, b, (((1,), (1,)), ((), ())),
                               preferred_element_type=jnp.float32)


# ---------------------------------------------------------------------------
# Pallas kernel: one full encoder layer for a slab of `rows = nb*S` tokens
# ---------------------------------------------------------------------------
def encoder_layer_kernel(x_ref, bias_ref, wqkv_ref, bqkv_ref, wo_ref,
                         vec_ref, w1_ref, b1_ref, w2_ref, out_ref):
    x = x_ref[...]               # (R, D)   R = batches_per_step * S
    bias = bias_ref[0]           # (R, R)   additive mask bias (block-diagonal)

    # ---- multi-head attention, accumulated directly into the out-projection ----
    attn = jnp.zeros_like(x)                                        # (R, D) f32
    for h in range(H):
        # Per-head projections; leading-dim weight indexing only (no lane
        # slicing).  1/sqrt(HD) is already folded into the Q weights/bias.
        qh = _dot_t(x, wqkv_ref[h]) + bqkv_ref[h:h + 1]             # (R, HD)
        kh = _dot_t(x, wqkv_ref[H + h]) + bqkv_ref[H + h:H + h + 1]
        vh = _dot_t(x, wqkv_ref[2 * H + h]) + bqkv_ref[2 * H + h:2 * H + h + 1]

        s = _dot_t(qh, kh) + bias                                   # (R, R)
        s = s - jnp.max(s, axis=-1, keepdims=True)
        e = jnp.exp(s)
        p = e * pl.reciprocal(jnp.sum(e, axis=-1, keepdims=True), approx=True)
        ctx = jnp.dot(p, vh, preferred_element_type=jnp.float32)    # (R, HD)
        attn = attn + jnp.dot(ctx, wo_ref[h],
                              preferred_element_type=jnp.float32)   # (R, D)
    attn = attn + vec_ref[0:1, :]                                   # + bo

    def layer_norm(v, gamma, beta):
        mu = jnp.mean(v, axis=-1, keepdims=True)
        c = v - mu
        var = jnp.mean(c * c, axis=-1, keepdims=True)
        return c * jax.lax.rsqrt(var + LN_EPS) * gamma + beta

    # dropout == identity (eval mode)
    x1 = layer_norm(x + attn, vec_ref[1:2, :], vec_ref[2:3, :])

    # ---- feed-forward sublayer: fc2(relu(fc1(x))) ----
    h1 = jnp.dot(x1, w1_ref[...], preferred_element_type=jnp.float32) + b1_ref[...]
    h1 = jnp.maximum(h1, 0.0)
    ff = jnp.dot(h1, w2_ref[...], preferred_element_type=jnp.float32) + vec_ref[5:6, :]

    out_ref[...] = layer_norm(x1 + ff, vec_ref[3:4, :], vec_ref[4:5, :])


# ---------------------------------------------------------------------------
# Wrapper-side packing / layout plumbing
# ---------------------------------------------------------------------------
def _batches_per_step():
    """Batch elements processed per grid step.

    Single-TC chips (v5e / v6e): merge the whole batch into one grid step to
    amortize per-step overhead.  Dual-TC chips (v7x, v4/v5p megacore): keep a
    batch-parallel grid so both TensorCores get work.
    """
    try:
        kind = jax.devices()[0].device_kind.lower()
    except Exception:
        return B
    single_tc = any(t in kind for t in ("v5e", "v5 lite", "v6e", "v6 lite"))
    return B if single_tc else 1


def _full_spec(shape):
    """Whole-array block, grid-invariant (loaded once), explicit VMEM."""
    nd = len(shape)
    return pl.BlockSpec(shape, lambda g, _nd=nd: (0,) * _nd,
                        memory_space=pltpu.MemorySpace.VMEM)


def _pack_params(params):
    (wq, bq, wk, bk, wv, bv, wo, bo,
     g1, beta1, g2, beta2, w1, b1, w2, b2) = params
    scale = jnp.float32(1.0 / math.sqrt(HD))

    def heads_w(w):      # (D, H*HD) -> (H, HD, D): [h] == w[:, h*HD:(h+1)*HD].T
        return w.reshape(D, H, HD).transpose(1, 2, 0)

    def heads_b(b):      # (1, H*HD) -> (H, HD)
        return b.reshape(H, HD)

    wqkv_h = jnp.concatenate(
        [heads_w(wq * scale), heads_w(wk), heads_w(wv)], axis=0)     # (3H, HD, D)
    bqkv_h = jnp.concatenate(
        [heads_b(bq * scale), heads_b(bk), heads_b(bv)], axis=0)     # (3H, HD)
    wo_h = wo.reshape(H, HD, D)                                      # (H, HD, D)
    vecs = jnp.concatenate([bo, g1, beta1, g2, beta2, b2], axis=0)   # (6, D)
    return wqkv_h, bqkv_h, wo_h, vecs, w1, b1, w2


def _block_diag_bias(mask, nb):
    """(B,S,S) 0/1 mask -> (B//nb, nb*S, nb*S) additive bias.

    -1e9 where the mask is 0 or across different batch elements merged into the
    same grid step; 0 elsewhere.  (softmax(s + bias) == softmax of masked_fill)
    """
    g = B // nb
    bias = jnp.where(mask == 0.0, jnp.float32(NEG_INF), jnp.float32(0.0))
    bias = bias.reshape(g, nb, S, S)
    eye = jnp.eye(nb, dtype=jnp.float32)
    big = (eye[None, :, None, :, None] * bias[:, :, :, None, :]
           + (1.0 - eye)[None, :, None, :, None] * jnp.float32(NEG_INF))
    return big.reshape(g, nb * S, nb * S)


@functools.partial(jax.jit, static_argnames=("nb",))
def encoder_layer(x, mask, params, *, nb):
    wqkv_h, bqkv_h, wo_h, vecs, w1, b1, w2 = _pack_params(params)
    rows = nb * S
    grid = (B // nb,)
    x2d = x.reshape(B * S, D)
    bias = _block_diag_bias(mask, nb)

    vm = pltpu.MemorySpace.VMEM
    in_specs = [
        pl.BlockSpec((rows, D), lambda g: (g, 0), memory_space=vm),          # x slab
        pl.BlockSpec((1, rows, rows), lambda g: (g, 0, 0), memory_space=vm),  # mask bias
        _full_spec(wqkv_h.shape),
        _full_spec(bqkv_h.shape),
        _full_spec(wo_h.shape),
        _full_spec(vecs.shape),
        _full_spec(w1.shape),
        _full_spec(b1.shape),
        _full_spec(w2.shape),
    ]
    out_spec = pl.BlockSpec((rows, D), lambda g: (g, 0), memory_space=vm)

    flops = int(2 * B * S * D * (3 * D + D + 2 * DFF)
                + (B // nb) * H * 4 * rows * rows * HD)
    transcendentals = int((B // nb) * H * rows * rows + 4 * B * S)
    bytes_accessed = int(4 * (2 * B * S * D + (B // nb) * rows * rows
                              + wqkv_h.size + bqkv_h.size + wo_h.size
                              + vecs.size + w1.size + b1.size + w2.size))

    out2d = pl.pallas_call(
        encoder_layer_kernel,
        out_shape=jax.ShapeDtypeStruct((B * S, D), jnp.float32),
        grid_spec=pl.GridSpec(grid=grid, in_specs=in_specs, out_specs=out_spec),
        compiler_params=pltpu.CompilerParams(
            dimension_semantics=("parallel",)),
        cost_estimate=pl.CostEstimate(flops=flops,
                                      transcendentals=transcendentals,
                                      bytes_accessed=bytes_accessed),
    )(x2d, bias, wqkv_h, bqkv_h, wo_h, vecs, w1, b1, w2)
    return out2d.reshape(B, S, D)


# ---------------------------------------------------------------------------
# Pure-JAX reference (mirrors the PyTorch forward, dropout in eval mode)
# ---------------------------------------------------------------------------
def reference_forward(x, mask, params):
    (wq, bq, wk, bk, wv, bv, wo, bo,
     g1, beta1, g2, beta2, w1, b1, w2, b2) = params

    def ln(v, g, b):
        mu = jnp.mean(v, axis=-1, keepdims=True)
        var = jnp.mean((v - mu) ** 2, axis=-1, keepdims=True)
        return (v - mu) / jnp.sqrt(var + LN_EPS) * g + b

    q = x @ wq + bq
    k = x @ wk + bk
    v = x @ wv + bv
    qh = q.reshape(B, S, H, HD).transpose(0, 2, 1, 3)
    kh = k.reshape(B, S, H, HD).transpose(0, 2, 1, 3)
    vh = v.reshape(B, S, H, HD).transpose(0, 2, 1, 3)
    scores = (qh @ kh.transpose(0, 1, 3, 2)) / math.sqrt(HD)
    scores = jnp.where(mask[:, None, :, :] == 0.0, NEG_INF, scores)
    p = jax.nn.softmax(scores, axis=-1)
    attn = (p @ vh).transpose(0, 2, 1, 3).reshape(B, S, D)
    attn = attn @ wo + bo
    x1 = ln(x + attn, g1, beta1)
    ff = jnp.maximum(x1 @ w1 + b1, 0.0) @ w2 + b2
    return ln(x1 + ff, g2, beta2)


# ---------------------------------------------------------------------------
# Main
# ---------------------------------------------------------------------------
if __name__ == "__main__":
    key = jax.random.PRNGKey(0)
    keys = jax.random.split(key, 20)

    def rnd(k, shape, scale=0.1):
        return (scale * jax.random.normal(k, shape)).astype(jnp.float32)

    # Weights are stored as (in_features, out_features) == PyTorch weight.T
    params = (
        rnd(keys[0], (D, D)),  rnd(keys[1], (1, D)),    # Wq, bq
        rnd(keys[2], (D, D)),  rnd(keys[3], (1, D)),    # Wk, bk
        rnd(keys[4], (D, D)),  rnd(keys[5], (1, D)),    # Wv, bv
        rnd(keys[6], (D, D)),  rnd(keys[7], (1, D)),    # Wo, bo
        jnp.ones((1, D), jnp.float32), jnp.zeros((1, D), jnp.float32),   # LN1
        jnp.ones((1, D), jnp.float32), jnp.zeros((1, D), jnp.float32),   # LN2
        rnd(keys[8], (D, DFF)), rnd(keys[9], (1, DFF)),  # fc1
        rnd(keys[10], (DFF, D)), rnd(keys[11], (1, D)),  # fc2
    )

    x = rnd(keys[12], (B, S, D), scale=1.0)

    # src_mask: 1 = attend, 0 = masked; mask last two key positions of batch 1
    mask = jnp.ones((B, S, S), jnp.float32)
    mask = mask.at[1, :, -2:].set(0.0)

    nb = _batches_per_step()
    out = jax.block_until_ready(encoder_layer(x, mask, params, nb=nb))

    ref = reference_forward(x, mask, params)
    assert out.shape == (B, S, D)
    err = float(jnp.max(jnp.abs(out - ref)))
    # approx=True softmax reciprocal (EUP vrcp) introduces small (<~1e-4) noise,
    # so check against a slightly relaxed tolerance.
    assert jnp.allclose(out, ref, atol=1e-3, rtol=1e-3), f"max abs err {err}"

    print("KERNEL_OK")
</pallas_src>

<mosaic_0001>
module attributes {stable_mosaic.version = 11 : i64} {
  func.func @encoder_layer_kernel(%arg0: i32, %arg1: memref<8x32xf32, #tpu.memory_space<vmem>>, %arg2: memref<1x8x8xf32, #tpu.memory_space<vmem>>, %arg3: memref<12x8x32xf32, #tpu.memory_space<vmem>>, %arg4: memref<12x8xf32, #tpu.memory_space<vmem>>, %arg5: memref<4x8x32xf32, #tpu.memory_space<vmem>>, %arg6: memref<6x32xf32, #tpu.memory_space<vmem>>, %arg7: memref<32x64xf32, #tpu.memory_space<vmem>>, %arg8: memref<1x64xf32, #tpu.memory_space<vmem>>, %arg9: memref<64x32xf32, #tpu.memory_space<vmem>>, %arg10: memref<8x32xf32, #tpu.memory_space<vmem>>) attributes {dimension_semantics = [#tpu.dimension_semantics<parallel>], iteration_bounds = array<i64: 2>, scalar_prefetch = 0 : i64, scratch_operands = 0 : i64, tpu.core_type = #tpu.core_type<tc>, window_params = [{transform_indices = @transform_0, window_bounds = array<i64: 8, 32>}, {transform_indices = @transform_1, window_bounds = array<i64: 1, 8, 8>}, {pipeline_mode = #tpu.pipeline_mode<synchronous>, transform_indices = @transform_2, window_bounds = array<i64: 12, 8, 32>}, {pipeline_mode = #tpu.pipeline_mode<synchronous>, transform_indices = @transform_3, window_bounds = array<i64: 12, 8>}, {pipeline_mode = #tpu.pipeline_mode<synchronous>, transform_indices = @transform_4, window_bounds = array<i64: 4, 8, 32>}, {pipeline_mode = #tpu.pipeline_mode<synchronous>, transform_indices = @transform_5, window_bounds = array<i64: 6, 32>}, {pipeline_mode = #tpu.pipeline_mode<synchronous>, transform_indices = @transform_6, window_bounds = array<i64: 32, 64>}, {pipeline_mode = #tpu.pipeline_mode<synchronous>, transform_indices = @transform_7, window_bounds = array<i64: 1, 64>}, {pipeline_mode = #tpu.pipeline_mode<synchronous>, transform_indices = @transform_8, window_bounds = array<i64: 64, 32>}, {transform_indices = @transform_9, window_bounds = array<i64: 8, 32>}]} {
    %c0 = arith.constant 0 : index
    %c0_0 = arith.constant 0 : index
    %0 = vector.load %arg1[%c0, %c0_0] : memref<8x32xf32, #tpu.memory_space<vmem>>, vector<8x32xf32>
    %c0_1 = arith.constant 0 : index
    %c0_2 = arith.constant 0 : index
    %c0_3 = arith.constant 0 : index
    %1 = vector.load %arg2[%c0_1, %c0_2, %c0_3] : memref<1x8x8xf32, #tpu.memory_space<vmem>>, vector<1x8x8xf32>
    %2 = vector.shape_cast %1 : vector<1x8x8xf32> to vector<8x8xf32>
    %cst = arith.constant 0.000000e+00 : f32
    %3 = vector.broadcast %cst : f32 to vector<8x32xf32>
    %c0_4 = arith.constant 0 : index
    %c0_5 = arith.constant 0 : index
    %c0_6 = arith.constant 0 : index
    %4 = vector.load %arg3[%c0_4, %c0_5, %c0_6] : memref<12x8x32xf32, #tpu.memory_space<vmem>>, vector<1x8x32xf32>
    %5 = vector.shape_cast %4 : vector<1x8x32xf32> to vector<8x32xf32>
    %cst_7 = arith.constant dense<0.000000e+00> : vector<8x8xf32>
    %6 = tpu.matmul %0, %5, %cst_7 {dimension_numbers = #tpu.dot_dimension_numbers<[1], [1], [0], [0], [0, 0, 1, 0], [], []>} : vector<8x32xf32>, vector<8x32xf32>, vector<8x8xf32> -> vector<8x8xf32>
    %c0_8 = arith.constant 0 : index
    %c0_9 = arith.constant 0 : index
    %7 = vector.load %arg4[%c0_8, %c0_9] : memref<12x8xf32, #tpu.memory_space<vmem>>, vector<1x8xf32>
    %8 = vector.broadcast %7 : vector<1x8xf32> to vector<8x8xf32>
    %9 = arith.addf %6, %8 : vector<8x8xf32>
    %c4 = arith.constant 4 : index
    %c0_10 = arith.constant 0 : index
    %c0_11 = arith.constant 0 : index
    %10 = vector.load %arg3[%c4, %c0_10, %c0_11] : memref<12x8x32xf32, #tpu.memory_space<vmem>>, vector<1x8x32xf32>
    %11 = vector.shape_cast %10 : vector<1x8x32xf32> to vector<8x32xf32>
    %cst_12 = arith.constant dense<0.000000e+00> : vector<8x8xf32>
    %12 = tpu.matmul %0, %11, %cst_12 {dimension_numbers = #tpu.dot_dimension_numbers<[1], [1], [0], [0], [0, 0, 1, 0], [], []>} : vector<8x32xf32>, vector<8x32xf32>, vector<8x8xf32> -> vector<8x8xf32>
    %c4_13 = arith.constant 4 : index
    %c0_14 = arith.constant 0 : index
    %13 = vector.load %arg4[%c4_13, %c0_14] : memref<12x8xf32, #tpu.memory_space<vmem>>, vector<1x8xf32>
    %14 = vector.broadcast %13 : vector<1x8xf32> to vector<8x8xf32>
    %15 = arith.addf %12, %14 : vector<8x8xf32>
    %c8 = arith.constant 8 : index
    %c0_15 = arith.constant 0 : index
    %c0_16 = arith.constant 0 : index
    %16 = vector.load %arg3[%c8, %c0_15, %c0_16] : memref<12x8x32xf32, #tpu.memory_space<vmem>>, vector<1x8x32xf32>
    %17 = vector.shape_cast %16 : vector<1x8x32xf32> to vector<8x32xf32>
    %cst_17 = arith.constant dense<0.000000e+00> : vector<8x8xf32>
    %18 = tpu.matmul %0, %17, %cst_17 {dimension_numbers = #tpu.dot_dimension_numbers<[1], [1], [0], [0], [0, 0, 1, 0], [], []>} : vector<8x32xf32>, vector<8x32xf32>, vector<8x8xf32> -> vector<8x8xf32>
    %c8_18 = arith.constant 8 : index
    %c0_19 = arith.constant 0 : index
    %19 = vector.load %arg4[%c8_18, %c0_19] : memref<12x8xf32, #tpu.memory_space<vmem>>, vector<1x8xf32>
    %20 = vector.broadcast %19 : vector<1x8xf32> to vector<8x8xf32>
    %21 = arith.addf %18, %20 : vector<8x8xf32>
    %cst_20 = arith.constant dense<0.000000e+00> : vector<8x8xf32>
    %22 = tpu.matmul %9, %15, %cst_20 {dimension_numbers = #tpu.dot_dimension_numbers<[1], [1], [0], [0], [0, 0, 1, 0], [], []>} : vector<8x8xf32>, vector<8x8xf32>, vector<8x8xf32> -> vector<8x8xf32>
    %23 = arith.addf %22, %2 : vector<8x8xf32>
    %cst_21 = arith.constant dense<0xFF800000> : vector<8xf32>
    %24 = vector.multi_reduction <maximumf>, %23, %cst_21 [1] : vector<8x8xf32> to vector<8xf32>
    %25 = vector.shape_cast %24 : vector<8xf32> to vector<8x1xf32>
    %26 = vector.broadcast %25 : vector<8x1xf32> to vector<8x8xf32>
    %27 = arith.subf %23, %26 : vector<8x8xf32>
    %28 = math.exp %27 : vector<8x8xf32>
    %cst_22 = arith.constant dense<0.000000e+00> : vector<8xf32>
    %29 = vector.multi_reduction <add>, %28, %cst_22 [1] : vector<8x8xf32> to vector<8xf32>
    %30 = vector.shape_cast %29 : vector<8xf32> to vector<8x1xf32>
    %31 = tpu.reciprocal %30 {approx = true} : vector<8x1xf32> -> vector<8x1xf32>
    %32 = vector.broadcast %31 : vector<8x1xf32> to vector<8x8xf32>
    %33 = arith.mulf %28, %32 : vector<8x8xf32>
    %cst_23 = arith.constant dense<0.000000e+00> : vector<8x8xf32>
    %34 = tpu.matmul %33, %21, %cst_23 {dimension_numbers = #tpu.dot_dimension_numbers<[1], [0], [0], [1], [0, 0, 1, 1], [], []>} : vector<8x8xf32>, vector<8x8xf32>, vector<8x8xf32> -> vector<8x8xf32>
    %c0_24 = arith.constant 0 : index
    %c0_25 = arith.constant 0 : index
    %c0_26 = arith.constant 0 : index
    %35 = vector.load %arg5[%c0_24, %c0_25, %c0_26] : memref<4x8x32xf32, #tpu.memory_space<vmem>>, vector<1x8x32xf32>
    %36 = vector.shape_cast %35 : vector<1x8x32xf32> to vector<8x32xf32>
    %cst_27 = arith.constant dense<0.000000e+00> : vector<8x32xf32>
    %37 = tpu.matmul %34, %36, %cst_27 {dimension_numbers = #tpu.dot_dimension_numbers<[1], [0], [0], [1], [0, 0, 1, 1], [], []>} : vector<8x8xf32>, vector<8x32xf32>, vector<8x32xf32> -> vector<8x32xf32>
    %38 = arith.addf %3, %37 : vector<8x32xf32>
    %c1 = arith.constant 1 : index
    %c0_28 = arith.constant 0 : index
    %c0_29 = arith.constant 0 : index
    %39 = vector.load %arg3[%c1, %c0_28, %c0_29] : memref<12x8x32xf32, #tpu.memory_space<vmem>>, vector<1x8x32xf32>
    %40 = vector.shape_cast %39 : vector<1x8x32xf32> to vector<8x32xf32>
    %cst_30 = arith.constant dense<0.000000e+00> : vector<8x8xf32>
    %41 = tpu.matmul %0, %40, %cst_30 {dimension_numbers = #tpu.dot_dimension_numbers<[1], [1], [0], [0], [0, 0, 1, 0], [], []>} : vector<8x32xf32>, vector<8x32xf32>, vector<8x8xf32> -> vector<8x8xf32>
    %c1_31 = arith.constant 1 : index
    %c0_32 = arith.constant 0 : index
    %42 = vector.load %arg4[%c1_31, %c0_32] : memref<12x8xf32, #tpu.memory_space<vmem>>, vector<1x8xf32>
    %43 = vector.broadcast %42 : vector<1x8xf32> to vector<8x8xf32>
    %44 = arith.addf %41, %43 : vector<8x8xf32>
    %c5 = arith.constant 5 : index
    %c0_33 = arith.constant 0 : index
    %c0_34 = arith.constant 0 : index
    %45 = vector.load %arg3[%c5, %c0_33, %c0_34] : memref<12x8x32xf32, #tpu.memory_space<vmem>>, vector<1x8x32xf32>
    %46 = vector.shape_cast %45 : vector<1x8x32xf32> to vector<8x32xf32>
    %cst_35 = arith.constant dense<0.000000e+00> : vector<8x8xf32>
    %47 = tpu.matmul %0, %46, %cst_35 {dimension_numbers = #tpu.dot_dimension_numbers<[1], [1], [0], [0], [0, 0, 1, 0], [], []>} : vector<8x32xf32>, vector<8x32xf32>, vector<8x8xf32> -> vector<8x8xf32>
    %c5_36 = arith.constant 5 : index
    %c0_37 = arith.constant 0 : index
    %48 = vector.load %arg4[%c5_36, %c0_37] : memref<12x8xf32, #tpu.memory_space<vmem>>, vector<1x8xf32>
    %49 = vector.broadcast %48 : vector<1x8xf32> to vector<8x8xf32>
    %50 = arith.addf %47, %49 : vector<8x8xf32>
    %c9 = arith.constant 9 : index
    %c0_38 = arith.constant 0 : index
    %c0_39 = arith.constant 0 : index
    %51 = vector.load %arg3[%c9, %c0_38, %c0_39] : memref<12x8x32xf32, #tpu.memory_space<vmem>>, vector<1x8x32xf32>
    %52 = vector.shape_cast %51 : vector<1x8x32xf32> to vector<8x32xf32>
    %cst_40 = arith.constant dense<0.000000e+00> : vector<8x8xf32>
    %53 = tpu.matmul %0, %52, %cst_40 {dimension_numbers = #tpu.dot_dimension_numbers<[1], [1], [0], [0], [0, 0, 1, 0], [], []>} : vector<8x32xf32>, vector<8x32xf32>, vector<8x8xf32> -> vector<8x8xf32>
    %c9_41 = arith.constant 9 : index
    %c0_42 = arith.constant 0 : index
    %54 = vector.load %arg4[%c9_41, %c0_42] : memref<12x8xf32, #tpu.memory_space<vmem>>, vector<1x8xf32>
    %55 = vector.broadcast %54 : vector<1x8xf32> to vector<8x8xf32>
    %56 = arith.addf %53, %55 : vector<8x8xf32>
    %cst_43 = arith.constant dense<0.000000e+00> : vector<8x8xf32>
    %57 = tpu.matmul %44, %50, %cst_43 {dimension_numbers = #tpu.dot_dimension_numbers<[1], [1], [0], [0], [0, 0, 1, 0], [], []>} : vector<8x8xf32>, vector<8x8xf32>, vector<8x8xf32> -> vector<8x8xf32>
    %58 = arith.addf %57, %2 : vector<8x8xf32>
    %cst_44 = arith.constant dense<0xFF800000> : vector<8xf32>
    %59 = vector.multi_reduction <maximumf>, %58, %cst_44 [1] : vector<8x8xf32> to vector<8xf32>
    %60 = vector.shape_cast %59 : vector<8xf32> to vector<8x1xf32>
    %61 = vector.broadcast %60 : vector<8x1xf32> to vector<8x8xf32>
    %62 = arith.subf %58, %61 : vector<8x8xf32>
    %63 = math.exp %62 : vector<8x8xf32>
    %cst_45 = arith.constant dense<0.000000e+00> : vector<8xf32>
    %64 = vector.multi_reduction <add>, %63, %cst_45 [1] : vector<8x8xf32> to vector<8xf32>
    %65 = vector.shape_cast %64 : vector<8xf32> to vector<8x1xf32>
    %66 = tpu.reciprocal %65 {approx = true} : vector<8x1xf32> -> vector<8x1xf32>
    %67 = vector.broadcast %66 : vector<8x1xf32> to vector<8x8xf32>
    %68 = arith.mulf %63, %67 : vector<8x8xf32>
    %cst_46 = arith.constant dense<0.000000e+00> : vector<8x8xf32>
    %69 = tpu.matmul %68, %56, %cst_46 {dimension_numbers = #tpu.dot_dimension_numbers<[1], [0], [0], [1], [0, 0, 1, 1], [], []>} : vector<8x8xf32>, vector<8x8xf32>, vector<8x8xf32> -> vector<8x8xf32>
    %c1_47 = arith.constant 1 : index
    %c0_48 = arith.constant 0 : index
    %c0_49 = arith.constant 0 : index
    %70 = vector.load %arg5[%c1_47, %c0_48, %c0_49] : memref<4x8x32xf32, #tpu.memory_space<vmem>>, vector<1x8x32xf32>
    %71 = vector.shape_cast %70 : vector<1x8x32xf32> to vector<8x32xf32>
    %cst_50 = arith.constant dense<0.000000e+00> : vector<8x32xf32>
    %72 = tpu.matmul %69, %71, %cst_50 {dimension_numbers = #tpu.dot_dimension_numbers<[1], [0], [0], [1], [0, 0, 1, 1], [], []>} : vector<8x8xf32>, vector<8x32xf32>, vector<8x32xf32> -> vector<8x32xf32>
    %73 = arith.addf %38, %72 : vector<8x32xf32>
    %c2 = arith.constant 2 : index
    %c0_51 = arith.constant 0 : index
    %c0_52 = arith.constant 0 : index
    %74 = vector.load %arg3[%c2, %c0_51, %c0_52] : memref<12x8x32xf32, #tpu.memory_space<vmem>>, vector<1x8x32xf32>
    %75 = vector.shape_cast %74 : vector<1x8x32xf32> to vector<8x32xf32>
    %cst_53 = arith.constant dense<0.000000e+00> : vector<8x8xf32>
    %76 = tpu.matmul %0, %75, %cst_53 {dimension_numbers = #tpu.dot_dimension_numbers<[1], [1], [0], [0], [0, 0, 1, 0], [], []>} : vector<8x32xf32>, vector<8x32xf32>, vector<8x8xf32> -> vector<8x8xf32>
    %c2_54 = arith.constant 2 : index
    %c0_55 = arith.constant 0 : index
    %77 = vector.load %arg4[%c2_54, %c0_55] : memref<12x8xf32, #tpu.memory_space<vmem>>, vector<1x8xf32>
    %78 = vector.broadcast %77 : vector<1x8xf32> to vector<8x8xf32>
    %79 = arith.addf %76, %78 : vector<8x8xf32>
    %c6 = arith.constant 6 : index
    %c0_56 = arith.constant 0 : index
    %c0_57 = arith.constant 0 : index
    %80 = vector.load %arg3[%c6, %c0_56, %c0_57] : memref<12x8x32xf32, #tpu.memory_space<vmem>>, vector<1x8x32xf32>
    %81 = vector.shape_cast %80 : vector<1x8x32xf32> to vector<8x32xf32>
    %cst_58 = arith.constant dense<0.000000e+00> : vector<8x8xf32>
    %82 = tpu.matmul %0, %81, %cst_58 {dimension_numbers = #tpu.dot_dimension_numbers<[1], [1], [0], [0], [0, 0, 1, 0], [], []>} : vector<8x32xf32>, vector<8x32xf32>, vector<8x8xf32> -> vector<8x8xf32>
    %c6_59 = arith.constant 6 : index
    %c0_60 = arith.constant 0 : index
    %83 = vector.load %arg4[%c6_59, %c0_60] : memref<12x8xf32, #tpu.memory_space<vmem>>, vector<1x8xf32>
    %84 = vector.broadcast %83 : vector<1x8xf32> to vector<8x8xf32>
    %85 = arith.addf %82, %84 : vector<8x8xf32>
    %c10 = arith.constant 10 : index
    %c0_61 = arith.constant 0 : index
    %c0_62 = arith.constant 0 : index
    %86 = vector.load %arg3[%c10, %c0_61, %c0_62] : memref<12x8x32xf32, #tpu.memory_space<vmem>>, vector<1x8x32xf32>
    %87 = vector.shape_cast %86 : vector<1x8x32xf32> to vector<8x32xf32>
    %cst_63 = arith.constant dense<0.000000e+00> : vector<8x8xf32>
    %88 = tpu.matmul %0, %87, %cst_63 {dimension_numbers = #tpu.dot_dimension_numbers<[1], [1], [0], [0], [0, 0, 1, 0], [], []>} : vector<8x32xf32>, vector<8x32xf32>, vector<8x8xf32> -> vector<8x8xf32>
    %c10_64 = arith.constant 10 : index
    %c0_65 = arith.constant 0 : index
    %89 = vector.load %arg4[%c10_64, %c0_65] : memref<12x8xf32, #tpu.memory_space<vmem>>, vector<1x8xf32>
    %90 = vector.broadcast %89 : vector<1x8xf32> to vector<8x8xf32>
    %91 = arith.addf %88, %90 : vector<8x8xf32>
    %cst_66 = arith.constant dense<0.000000e+00> : vector<8x8xf32>
    %92 = tpu.matmul %79, %85, %cst_66 {dimension_numbers = #tpu.dot_dimension_numbers<[1], [1], [0], [0], [0, 0, 1, 0], [], []>} : vector<8x8xf32>, vector<8x8xf32>, vector<8x8xf32> -> vector<8x8xf32>
    %93 = arith.addf %92, %2 : vector<8x8xf32>
    %cst_67 = arith.constant dense<0xFF800000> : vector<8xf32>
    %94 = vector.multi_reduction <maximumf>, %93, %cst_67 [1] : vector<8x8xf32> to vector<8xf32>
    %95 = vector.shape_cast %94 : vector<8xf32> to vector<8x1xf32>
    %96 = vector.broadcast %95 : vector<8x1xf32> to vector<8x8xf32>
    %97 = arith.subf %93, %96 : vector<8x8xf32>
    %98 = math.exp %97 : vector<8x8xf32>
    %cst_68 = arith.constant dense<0.000000e+00> : vector<8xf32>
    %99 = vector.multi_reduction <add>, %98, %cst_68 [1] : vector<8x8xf32> to vector<8xf32>
    %100 = vector.shape_cast %99 : vector<8xf32> to vector<8x1xf32>
    %101 = tpu.reciprocal %100 {approx = true} : vector<8x1xf32> -> vector<8x1xf32>
    %102 = vector.broadcast %101 : vector<8x1xf32> to vector<8x8xf32>
    %103 = arith.mulf %98, %102 : vector<8x8xf32>
    %cst_69 = arith.constant dense<0.000000e+00> : vector<8x8xf32>
    %104 = tpu.matmul %103, %91, %cst_69 {dimension_numbers = #tpu.dot_dimension_numbers<[1], [0], [0], [1], [0, 0, 1, 1], [], []>} : vector<8x8xf32>, vector<8x8xf32>, vector<8x8xf32> -> vector<8x8xf32>
    %c2_70 = arith.constant 2 : index
    %c0_71 = arith.constant 0 : index
    %c0_72 = arith.constant 0 : index
    %105 = vector.load %arg5[%c2_70, %c0_71, %c0_72] : memref<4x8x32xf32, #tpu.memory_space<vmem>>, vector<1x8x32xf32>
    %106 = vector.shape_cast %105 : vector<1x8x32xf32> to vector<8x32xf32>
    %cst_73 = arith.constant dense<0.000000e+00> : vector<8x32xf32>
    %107 = tpu.matmul %104, %106, %cst_73 {dimension_numbers = #tpu.dot_dimension_numbers<[1], [0], [0], [1], [0, 0, 1, 1], [], []>} : vector<8x8xf32>, vector<8x32xf32>, vector<8x32xf32> -> vector<8x32xf32>
    %108 = arith.addf %73, %107 : vector<8x32xf32>
    %c3 = arith.constant 3 : index
    %c0_74 = arith.constant 0 : index
    %c0_75 = arith.constant 0 : index
    %109 = vector.load %arg3[%c3, %c0_74, %c0_75] : memref<12x8x32xf32, #tpu.memory_space<vmem>>, vector<1x8x32xf32>
    %110 = vector.shape_cast %109 : vector<1x8x32xf32> to vector<8x32xf32>
    %cst_76 = arith.constant dense<0.000000e+00> : vector<8x8xf32>
    %111 = tpu.matmul %0, %110, %cst_76 {dimension_numbers = #tpu.dot_dimension_numbers<[1], [1], [0], [0], [0, 0, 1, 0], [], []>} : vector<8x32xf32>, vector<8x32xf32>, vector<8x8xf32> -> vector<8x8xf32>
    %c3_77 = arith.constant 3 : index
    %c0_78 = arith.constant 0 : index
    %112 = vector.load %arg4[%c3_77, %c0_78] : memref<12x8xf32, #tpu.memory_space<vmem>>, vector<1x8xf32>
    %113 = vector.broadcast %112 : vector<1x8xf32> to vector<8x8xf32>
    %114 = arith.addf %111, %113 : vector<8x8xf32>
    %c7 = arith.constant 7 : index
    %c0_79 = arith.constant 0 : index
    %c0_80 = arith.constant 0 : index
    %115 = vector.load %arg3[%c7, %c0_79, %c0_80] : memref<12x8x32xf32, #tpu.memory_space<vmem>>, vector<1x8x32xf32>
    %116 = vector.shape_cast %115 : vector<1x8x32xf32> to vector<8x32xf32>
    %cst_81 = arith.constant dense<0.000000e+00> : vector<8x8xf32>
    %117 = tpu.matmul %0, %116, %cst_81 {dimension_numbers = #tpu.dot_dimension_numbers<[1], [1], [0], [0], [0, 0, 1, 0], [], []>} : vector<8x32xf32>, vector<8x32xf32>, vector<8x8xf32> -> vector<8x8xf32>
    %c7_82 = arith.constant 7 : index
    %c0_83 = arith.constant 0 : index
    %118 = vector.load %arg4[%c7_82, %c0_83] : memref<12x8xf32, #tpu.memory_space<vmem>>, vector<1x8xf32>
    %119 = vector.broadcast %118 : vector<1x8xf32> to vector<8x8xf32>
    %120 = arith.addf %117, %119 : vector<8x8xf32>
    %c11 = arith.constant 11 : index
    %c0_84 = arith.constant 0 : index
    %c0_85 = arith.constant 0 : index
    %121 = vector.load %arg3[%c11, %c0_84, %c0_85] : memref<12x8x32xf32, #tpu.memory_space<vmem>>, vector<1x8x32xf32>
    %122 = vector.shape_cast %121 : vector<1x8x32xf32> to vector<8x32xf32>
    %cst_86 = arith.constant dense<0.000000e+00> : vector<8x8xf32>
    %123 = tpu.matmul %0, %122, %cst_86 {dimension_numbers = #tpu.dot_dimension_numbers<[1], [1], [0], [0], [0, 0, 1, 0], [], []>} : vector<8x32xf32>, vector<8x32xf32>, vector<8x8xf32> -> vector<8x8xf32>
    %c11_87 = arith.constant 11 : index
    %c0_88 = arith.constant 0 : index
    %124 = vector.load %arg4[%c11_87, %c0_88] : memref<12x8xf32, #tpu.memory_space<vmem>>, vector<1x8xf32>
    %125 = vector.broadcast %124 : vector<1x8xf32> to vector<8x8xf32>
    %126 = arith.addf %123, %125 : vector<8x8xf32>
    %cst_89 = arith.constant dense<0.000000e+00> : vector<8x8xf32>
    %127 = tpu.matmul %114, %120, %cst_89 {dimension_numbers = #tpu.dot_dimension_numbers<[1], [1], [0], [0], [0, 0, 1, 0], [], []>} : vector<8x8xf32>, vector<8x8xf32>, vector<8x8xf32> -> vector<8x8xf32>
    %128 = arith.addf %127, %2 : vector<8x8xf32>
    %cst_90 = arith.constant dense<0xFF800000> : vector<8xf32>
    %129 = vector.multi_reduction <maximumf>, %128, %cst_90 [1] : vector<8x8xf32> to vector<8xf32>
    %130 = vector.shape_cast %129 : vector<8xf32> to vector<8x1xf32>
    %131 = vector.broadcast %130 : vector<8x1xf32> to vector<8x8xf32>
    %132 = arith.subf %128, %131 : vector<8x8xf32>
    %133 = math.exp %132 : vector<8x8xf32>
    %cst_91 = arith.constant dense<0.000000e+00> : vector<8xf32>
    %134 = vector.multi_reduction <add>, %133, %cst_91 [1] : vector<8x8xf32> to vector<8xf32>
    %135 = vector.shape_cast %134 : vector<8xf32> to vector<8x1xf32>
    %136 = tpu.reciprocal %135 {approx = true} : vector<8x1xf32> -> vector<8x1xf32>
    %137 = vector.broadcast %136 : vector<8x1xf32> to vector<8x8xf32>
    %138 = arith.mulf %133, %137 : vector<8x8xf32>
    %cst_92 = arith.constant dense<0.000000e+00> : vector<8x8xf32>
    %139 = tpu.matmul %138, %126, %cst_92 {dimension_numbers = #tpu.dot_dimension_numbers<[1], [0], [0], [1], [0, 0, 1, 1], [], []>} : vector<8x8xf32>, vector<8x8xf32>, vector<8x8xf32> -> vector<8x8xf32>
    %c3_93 = arith.constant 3 : index
    %c0_94 = arith.constant 0 : index
    %c0_95 = arith.constant 0 : index
    %140 = vector.load %arg5[%c3_93, %c0_94, %c0_95] : memref<4x8x32xf32, #tpu.memory_space<vmem>>, vector<1x8x32xf32>
    %141 = vector.shape_cast %140 : vector<1x8x32xf32> to vector<8x32xf32>
    %cst_96 = arith.constant dense<0.000000e+00> : vector<8x32xf32>
    %142 = tpu.matmul %139, %141, %cst_96 {dimension_numbers = #tpu.dot_dimension_numbers<[1], [0], [0], [1], [0, 0, 1, 1], [], []>} : vector<8x8xf32>, vector<8x32xf32>, vector<8x32xf32> -> vector<8x32xf32>
    %143 = arith.addf %108, %142 : vector<8x32xf32>
    %c0_97 = arith.constant 0 : index
    %c0_98 = arith.constant 0 : index
    %144 = vector.load %arg6[%c0_97, %c0_98] : memref<6x32xf32, #tpu.memory_space<vmem>>, vector<1x32xf32>
    %145 = vector.broadcast %144 : vector<1x32xf32> to vector<8x32xf32>
    %146 = arith.addf %143, %145 : vector<8x32xf32>
    %147 = arith.addf %0, %146 : vector<8x32xf32>
    %c1_99 = arith.constant 1 : index
    %c0_100 = arith.constant 0 : index
    %148 = vector.load %arg6[%c1_99, %c0_100] : memref<6x32xf32, #tpu.memory_space<vmem>>, vector<1x32xf32>
    %c2_101 = arith.constant 2 : index
    %c0_102 = arith.constant 0 : index
    %149 = vector.load %arg6[%c2_101, %c0_102] : memref<6x32xf32, #tpu.memory_space<vmem>>, vector<1x32xf32>
    %cst_103 = arith.constant dense<0.000000e+00> : vector<8xf32>
    %150 = vector.multi_reduction <add>, %147, %cst_103 [1] : vector<8x32xf32> to vector<8xf32>
    %151 = vector.shape_cast %150 : vector<8xf32> to vector<8x1xf32>
    %cst_104 = arith.constant 3.200000e+01 : f32
    %152 = vector.broadcast %cst_104 : f32 to vector<8x1xf32>
    %153 = arith.divf %151, %152 : vector<8x1xf32>
    %154 = vector.broadcast %153 : vector<8x1xf32> to vector<8x32xf32>
    %155 = arith.subf %147, %154 : vector<8x32xf32>
    %156 = arith.mulf %155, %155 : vector<8x32xf32>
    %cst_105 = arith.constant dense<0.000000e+00> : vector<8xf32>
    %157 = vector.multi_reduction <add>, %156, %cst_105 [1] : vector<8x32xf32> to vector<8xf32>
    %158 = vector.shape_cast %157 : vector<8xf32> to vector<8x1xf32>
    %cst_106 = arith.constant 3.200000e+01 : f32
    %159 = vector.broadcast %cst_106 : f32 to vector<8x1xf32>
    %160 = arith.divf %158, %159 : vector<8x1xf32>
    %cst_107 = arith.constant 9.99999974E-6 : f32
    %161 = vector.broadcast %cst_107 : f32 to vector<8x1xf32>
    %162 = arith.addf %160, %161 : vector<8x1xf32>
    %163 = math.rsqrt %162 : vector<8x1xf32>
    %164 = vector.broadcast %163 : vector<8x1xf32> to vector<8x32xf32>
    %165 = arith.mulf %155, %164 : vector<8x32xf32>
    %166 = vector.broadcast %148 : vector<1x32xf32> to vector<8x32xf32>
    %167 = arith.mulf %165, %166 : vector<8x32xf32>
    %168 = vector.broadcast %149 : vector<1x32xf32> to vector<8x32xf32>
    %169 = arith.addf %167, %168 : vector<8x32xf32>
    %c0_108 = arith.constant 0 : index
    %c0_109 = arith.constant 0 : index
    %170 = vector.load %arg7[%c0_108, %c0_109] : memref<32x64xf32, #tpu.memory_space<vmem>>, vector<32x64xf32>
    %cst_110 = arith.constant dense<0.000000e+00> : vector<8x64xf32>
    %171 = tpu.matmul %169, %170, %cst_110 {dimension_numbers = #tpu.dot_dimension_numbers<[1], [0], [0], [1], [0, 0, 1, 1], [], []>} : vector<8x32xf32>, vector<32x64xf32>, vector<8x64xf32> -> vector<8x64xf32>
    %c0_111 = arith.constant 0 : index
    %c0_112 = arith.constant 0 : index
    %172 = vector.load %arg8[%c0_111, %c0_112] : memref<1x64xf32, #tpu.memory_space<vmem>>, vector<1x64xf32>
    %173 = vector.broadcast %172 : vector<1x64xf32> to vector<8x64xf32>
    %174 = arith.addf %171, %173 : vector<8x64xf32>
    %cst_113 = arith.constant 0.000000e+00 : f32
    %175 = vector.broadcast %cst_113 : f32 to vector<8x64xf32>
    %176 = arith.maximumf %174, %175 : vector<8x64xf32>
    %c0_114 = arith.constant 0 : index
    %c0_115 = arith.constant 0 : index
    %177 = vector.load %arg9[%c0_114, %c0_115] : memref<64x32xf32, #tpu.memory_space<vmem>>, vector<64x32xf32>
    %cst_116 = arith.constant dense<0.000000e+00> : vector<8x32xf32>
    %178 = tpu.matmul %176, %177, %cst_116 {dimension_numbers = #tpu.dot_dimension_numbers<[1], [0], [0], [1], [0, 0, 1, 1], [], []>} : vector<8x64xf32>, vector<64x32xf32>, vector<8x32xf32> -> vector<8x32xf32>
    %c5_117 = arith.constant 5 : index
    %c0_118 = arith.constant 0 : index
    %179 = vector.load %arg6[%c5_117, %c0_118] : memref<6x32xf32, #tpu.memory_space<vmem>>, vector<1x32xf32>
    %180 = vector.broadcast %179 : vector<1x32xf32> to vector<8x32xf32>
    %181 = arith.addf %178, %180 : vector<8x32xf32>
    %182 = arith.addf %169, %181 : vector<8x32xf32>
    %c3_119 = arith.constant 3 : index
    %c0_120 = arith.constant 0 : index
    %183 = vector.load %arg6[%c3_119, %c0_120] : memref<6x32xf32, #tpu.memory_space<vmem>>, vector<1x32xf32>
    %c4_121 = arith.constant 4 : index
    %c0_122 = arith.constant 0 : index
    %184 = vector.load %arg6[%c4_121, %c0_122] : memref<6x32xf32, #tpu.memory_space<vmem>>, vector<1x32xf32>
    %cst_123 = arith.constant dense<0.000000e+00> : vector<8xf32>
    %185 = vector.multi_reduction <add>, %182, %cst_123 [1] : vector<8x32xf32> to vector<8xf32>
    %186 = vector.shape_cast %185 : vector<8xf32> to vector<8x1xf32>
    %cst_124 = arith.constant 3.200000e+01 : f32
    %187 = vector.broadcast %cst_124 : f32 to vector<8x1xf32>
    %188 = arith.divf %186, %187 : vector<8x1xf32>
    %189 = vector.broadcast %188 : vector<8x1xf32> to vector<8x32xf32>
    %190 = arith.subf %182, %189 : vector<8x32xf32>
    %191 = arith.mulf %190, %190 : vector<8x32xf32>
    %cst_125 = arith.constant dense<0.000000e+00> : vector<8xf32>
    %192 = vector.multi_reduction <add>, %191, %cst_125 [1] : vector<8x32xf32> to vector<8xf32>
    %193 = vector.shape_cast %192 : vector<8xf32> to vector<8x1xf32>
    %cst_126 = arith.constant 3.200000e+01 : f32
    %194 = vector.broadcast %cst_126 : f32 to vector<8x1xf32>
    %195 = arith.divf %193, %194 : vector<8x1xf32>
    %cst_127 = arith.constant 9.99999974E-6 : f32
    %196 = vector.broadcast %cst_127 : f32 to vector<8x1xf32>
    %197 = arith.addf %195, %196 : vector<8x1xf32>
    %198 = math.rsqrt %197 : vector<8x1xf32>
    %199 = vector.broadcast %198 : vector<8x1xf32> to vector<8x32xf32>
    %200 = arith.mulf %190, %199 : vector<8x32xf32>
    %201 = vector.broadcast %183 : vector<1x32xf32> to vector<8x32xf32>
    %202 = arith.mulf %200, %201 : vector<8x32xf32>
    %203 = vector.broadcast %184 : vector<1x32xf32> to vector<8x32xf32>
    %204 = arith.addf %202, %203 : vector<8x32xf32>
    %c0_128 = arith.constant 0 : index
    %c0_129 = arith.constant 0 : index
    %205 = vector.load %arg10[%c0_128, %c0_129] : memref<8x32xf32, #tpu.memory_space<vmem>>, vector<8x32xf32>
    tpu.vector_store %arg10[%c0_128, %c0_129], %204 {strides = array<i32>} : memref<8x32xf32, #tpu.memory_space<vmem>>, vector<8x32xf32>,
    return
  }
  func.func @transform_0(%arg0: i32) -> (i32, i32) {
    %c0_i32 = arith.constant 0 : i32
    %c0_i32_0 = arith.constant 0 : i32
    return %arg0, %c0_i32 : i32, i32
  }
  func.func @transform_1(%arg0: i32) -> (i32, i32, i32) {
    %c0_i32 = arith.constant 0 : i32
    %c0_i32_0 = arith.constant 0 : i32
    %c0_i32_1 = arith.constant 0 : i32
    return %arg0, %c0_i32, %c0_i32_0 : i32, i32, i32
  }
  func.func @transform_2(%arg0: i32) -> (i32, i32, i32) {
    %c0_i32 = arith.constant 0 : i32
    %c0_i32_0 = arith.constant 0 : i32
    %c0_i32_1 = arith.constant 0 : i32
    %c0_i32_2 = arith.constant 0 : i32
    return %c0_i32, %c0_i32_0, %c0_i32_1 : i32, i32, i32
  }
  func.func @transform_3(%arg0: i32) -> (i32, i32) {
    %c0_i32 = arith.constant 0 : i32
    %c0_i32_0 = arith.constant 0 : i32
    %c0_i32_1 = arith.constant 0 : i32
    return %c0_i32, %c0_i32_0 : i32, i32
  }
  func.func @transform_4(%arg0: i32) -> (i32, i32, i32) {
    %c0_i32 = arith.constant 0 : i32
    %c0_i32_0 = arith.constant 0 : i32
    %c0_i32_1 = arith.constant 0 : i32
    %c0_i32_2 = arith.constant 0 : i32
    return %c0_i32, %c0_i32_0, %c0_i32_1 : i32, i32, i32
  }
  func.func @transform_5(%arg0: i32) -> (i32, i32) {
    %c0_i32 = arith.constant 0 : i32
    %c0_i32_0 = arith.constant 0 : i32
    %c0_i32_1 = arith.constant 0 : i32
    return %c0_i32, %c0_i32_0 : i32, i32
  }
  func.func @transform_6(%arg0: i32) -> (i32, i32) {
    %c0_i32 = arith.constant 0 : i32
    %c0_i32_0 = arith.constant 0 : i32
    %c0_i32_1 = arith.constant 0 : i32
    return %c0_i32, %c0_i32_0 : i32, i32
  }
  func.func @transform_7(%arg0: i32) -> (i32, i32) {
    %c0_i32 = arith.constant 0 : i32
    %c0_i32_0 = arith.constant 0 : i32
    %c0_i32_1 = arith.constant 0 : i32
    return %c0_i32, %c0_i32_0 : i32, i32
  }
  func.func @transform_8(%arg0: i32) -> (i32, i32) {
    %c0_i32 = arith.constant 0 : i32
    %c0_i32_0 = arith.constant 0 : i32
    %c0_i32_1 = arith.constant 0 : i32
    return %c0_i32, %c0_i32_0 : i32, i32
  }
  func.func @transform_9(%arg0: i32) -> (i32, i32) {
    %c0_i32 = arith.constant 0 : i32
    %c0_i32_0 = arith.constant 0 : i32
    return %arg0, %c0_i32 : i32, i32
  }
}

</mosaic_0001>

<llo_original>
// kernel: encoder_layer.1
$region0: #{encoder_layer.1}
  #allocation0 [shape = 'u32[]', space=smem, size = 0x4, offset = 0x4, fixed_abs, tag = 'smem constant byte address 0x4 - core index']
  #allocation1 [shape = 'u32[144,128]{1,0:T(1,128)}', space=vmem, size = 0x12000, scoped, tag = 'internal scratch']
  %s0 = inlined_call_operand.vmem [shape: f32[16,32], index: 0, kind: input, shape index: {}]
  %s1 = inlined_call_operand.vmem [shape: f32[2,8,8], index: 1, kind: input, shape index: {}]
  %s2 = inlined_call_operand.vmem [shape: f32[12,8,32], index: 2, kind: input, shape index: {}]
  %s3 = inlined_call_operand.vmem [shape: f32[12,8], index: 3, kind: input, shape index: {}]
  %s4 = inlined_call_operand.vmem [shape: f32[4,8,32], index: 4, kind: input, shape index: {}]
  %s5 = inlined_call_operand.vmem [shape: f32[6,32], index: 5, kind: input, shape index: {}]
  %s6 = inlined_call_operand.vmem [shape: f32[32,64], index: 6, kind: input, shape index: {}]
  %s7 = inlined_call_operand.vmem [shape: f32[1,64], index: 7, kind: input, shape index: {}]
  %s8 = inlined_call_operand.vmem [shape: f32[64,32], index: 8, kind: input, shape index: {}]
  %s9 = inlined_call_operand.hbm [shape: f32[16,32], index: 9, kind: output, shape index: {}]
  %s10 = sld [smem:[#allocation0]]
  $region69: #{encoder_layer.1} parent=0
    _
  %s12 = ssub.s32 1, %s10
  %s13 = scalar_select 0, %s12, %s10
  $region1: #{encoder_layer.1} parent=0
    #allocation2 [shape = 'u8[8192]{0}', space=vmem, size = 0x2000, scoped, tag = 'output window, operand 0']
    #allocation3 [shape = 's32[2]{0}', space=sflag, size = 0x8, scoped, tag = 'scoped memory for encoder_layer.1']
    %14 = vsyncpa [#allocation3], 0
    %s15 = scalar_lea.sflag [#allocation3], 1
    %16 = vsyncpa %s15, 0
    loop: start=0, step=1, limit=4
    $region2: #{encoder_layer.1} parent=1 // loop_pre_header
      _
    $region3: #{encoder_layer.1} parent=1 // loop_header
      %s18 = sphi 0, %s22
      %p19 = scmp.ge.s32.totalorder %s18, 4
      %s28 = sphi 0, %s30
      %s31 = sphi 0, %s28
      %s32 = sphi 0, %s31
      %s48 = sphi 0, %s32
      %s54 = sphi 0, %s56
      %s57 = sphi 0, %s54
      %s58 = sphi 0, %s57
      %s74 = sphi 0, %s58
      %s78 = sphi 0, %s78
      %s80 = sphi 0, %s78
      %s81 = sphi 0, %s80
      %s95 = sphi 0, %s81
      %s99 = sphi 0, %s99
      %s101 = sphi 0, %s99
      %s102 = sphi 0, %s101
      %s116 = sphi 0, %s102
      %s120 = sphi 0, %s120
      %s122 = sphi 0, %s120
      %s123 = sphi 0, %s122
      %s137 = sphi 0, %s123
      %s141 = sphi 0, %s141
      %s143 = sphi 0, %s141
      %s144 = sphi 0, %s143
      %s158 = sphi 0, %s144
      %s162 = sphi 0, %s162
      %s164 = sphi 0, %s162
      %s165 = sphi 0, %s164
      %s179 = sphi 0, %s165
      %s183 = sphi 0, %s183
      %s185 = sphi 0, %s183
      %s186 = sphi 0, %s185
      %s200 = sphi 0, %s186
      %s204 = sphi 0, %s204
      %s206 = sphi 0, %s204
      %s207 = sphi 0, %s206
      %s221 = sphi 0, %s207
      %s227 = sphi 0, %s229
      %s230 = sphi 0, %s227
      %s231 = sphi 0, %s230
      %s247 = sphi 0, %s231
    $region4: #{encoder_layer.1} parent=1 // loop_header_branch
      %21 = sbr.rel (%p19) target = $region8
    $region5: #{encoder_layer.1} parent=1 // loop_body
      %s23 = ssub.s32 %s18, 1
      %s24 = ssub.s32 %s18, 2
      %s25 = sadd.s32 %s18, 1
      %s26 = ssub.s32 %s18, %s25
      %p27 = scmp.eq.s32.totalorder %s26, 0
      %s29 = sadd.s32 %s28, 1
      %s30 = scalar_select %p27, %s28, %s29
      %p33 = pneg %p27
      %p34 = scmp.eq.s32.totalorder %s18, 1
      %p35 = por %p33, %p34
      %p36 = scmp.ne.s32.totalorder %s28, %s31
      %p37 = scmp.eq.s32.totalorder %s18, 0
      %p38 = por %p36, %p37
      %p39 = scmp.ne.s32.totalorder %s28, %s31
      %p40 = scmp.eq.s32.totalorder %s23, 1
      %p41 = por %p39, %p40
      %p42 = scmp.ne.s32.totalorder %s31, %s32
      %p43 = scmp.eq.s32.totalorder %s23, 0
      %p44 = por %p42, %p43
      %p45 = scmp.ne.s32.totalorder %s31, %s32
      %p46 = scmp.eq.s32.totalorder %s24, 1
      %p47 = por %p45, %p46
      %p49 = scmp.ne.s32.totalorder %s32, %s48
      %p50 = scmp.eq.s32.totalorder %s24, 0
      %p51 = por %p49, %p50
      %s52 = ssub.s32 %s18, %s25
      %p53 = scmp.eq.s32.totalorder %s52, 0
      %s55 = sadd.s32 %s54, 1
      %s56 = scalar_select %p53, %s54, %s55
      %p59 = pneg %p53
      %p60 = scmp.eq.s32.totalorder %s18, 1
      %p61 = por %p59, %p60
      %p62 = scmp.ne.s32.totalorder %s54, %s57
      %p63 = scmp.eq.s32.totalorder %s18, 0
      %p64 = por %p62, %p63
      %p65 = scmp.ne.s32.totalorder %s54, %s57
      %p66 = scmp.eq.s32.totalorder %s23, 1
      %p67 = por %p65, %p66
      %p68 = scmp.ne.s32.totalorder %s57, %s58
      %p69 = scmp.eq.s32.totalorder %s23, 0
      %p70 = por %p68, %p69
      %p71 = scmp.ne.s32.totalorder %s57, %s58
      %p72 = scmp.eq.s32.totalorder %s24, 1
      %p73 = por %p71, %p72
      %p75 = scmp.ne.s32.totalorder %s58, %s74
      %p76 = scmp.eq.s32.totalorder %s24, 0
      %p77 = por %p75, %p76
      %s79 = sadd.s32 %s78, 1
      %p82 = scmp.eq.s32.totalorder %s18, 1
      %p83 = scmp.ne.s32.totalorder %s78, %s80
      %p84 = scmp.eq.s32.totalorder %s18, 0
      %p85 = por %p83, %p84
      %p86 = scmp.ne.s32.totalorder %s78, %s80
      %p87 = scmp.eq.s32.totalorder %s23, 1
      %p88 = por %p86, %p87
      %p89 = scmp.ne.s32.totalorder %s80, %s81
      %p90 = scmp.eq.s32.totalorder %s23, 0
      %p91 = por %p89, %p90
      %p92 = scmp.ne.s32.totalorder %s80, %s81
      %p93 = scmp.eq.s32.totalorder %s24, 1
      %p94 = por %p92, %p93
      %p96 = scmp.ne.s32.totalorder %s81, %s95
      %p97 = scmp.eq.s32.totalorder %s24, 0
      %p98 = por %p96, %p97
      %s100 = sadd.s32 %s99, 1
      %p103 = scmp.eq.s32.totalorder %s18, 1
      %p104 = scmp.ne.s32.totalorder %s99, %s101
      %p105 = scmp.eq.s32.totalorder %s18, 0
      %p106 = por %p104, %p105
      %p107 = scmp.ne.s32.totalorder %s99, %s101
      %p108 = scmp.eq.s32.totalorder %s23, 1
      %p109 = por %p107, %p108
      %p110 = scmp.ne.s32.totalorder %s101, %s102
      %p111 = scmp.eq.s32.totalorder %s23, 0
      %p112 = por %p110, %p111
      %p113 = scmp.ne.s32.totalorder %s101, %s102
      %p114 = scmp.eq.s32.totalorder %s24, 1
      %p115 = por %p113, %p114
      %p117 = scmp.ne.s32.totalorder %s102, %s116
      %p118 = scmp.eq.s32.totalorder %s24, 0
      %p119 = por %p117, %p118
      %s121 = sadd.s32 %s120, 1
      %p124 = scmp.eq.s32.totalorder %s18, 1
      %p125 = scmp.ne.s32.totalorder %s120, %s122
      %p126 = scmp.eq.s32.totalorder %s18, 0
      %p127 = por %p125, %p126
      %p128 = scmp.ne.s32.totalorder %s120, %s122
      %p129 = scmp.eq.s32.totalorder %s23, 1
      %p130 = por %p128, %p129
      %p131 = scmp.ne.s32.totalorder %s122, %s123
      %p132 = scmp.eq.s32.totalorder %s23, 0
      %p133 = por %p131, %p132
      %p134 = scmp.ne.s32.totalorder %s122, %s123
      %p135 = scmp.eq.s32.totalorder %s24, 1
      %p136 = por %p134, %p135
      %p138 = scmp.ne.s32.totalorder %s123, %s137
      %p139 = scmp.eq.s32.totalorder %s24, 0
      %p140 = por %p138, %p139
      %s142 = sadd.s32 %s141, 1
      %p145 = scmp.eq.s32.totalorder %s18, 1
      %p146 = scmp.ne.s32.totalorder %s141, %s143
      %p147 = scmp.eq.s32.totalorder %s18, 0
      %p148 = por %p146, %p147
      %p149 = scmp.ne.s32.totalorder %s141, %s143
      %p150 = scmp.eq.s32.totalorder %s23, 1
      %p151 = por %p149, %p150
      %p152 = scmp.ne.s32.totalorder %s143, %s144
      %p153 = scmp.eq.s32.totalorder %s23, 0
      %p154 = por %p152, %p153
      %p155 = scmp.ne.s32.totalorder %s143, %s144
      %p156 = scmp.eq.s32.totalorder %s24, 1
      %p157 = por %p155, %p156
      %p159 = scmp.ne.s32.totalorder %s144, %s158
      %p160 = scmp.eq.s32.totalorder %s24, 0
      %p161 = por %p159, %p160
      %s163 = sadd.s32 %s162, 1
      %p166 = scmp.eq.s32.totalorder %s18, 1
      %p167 = scmp.ne.s32.totalorder %s162, %s164
      %p168 = scmp.eq.s32.totalorder %s18, 0
      %p169 = por %p167, %p168
      %p170 = scmp.ne.s32.totalorder %s162, %s164
      %p171 = scmp.eq.s32.totalorder %s23, 1
      %p172 = por %p170, %p171
      %p173 = scmp.ne.s32.totalorder %s164, %s165
      %p174 = scmp.eq.s32.totalorder %s23, 0
      %p175 = por %p173, %p174
      %p176 = scmp.ne.s32.totalorder %s164, %s165
      %p177 = scmp.eq.s32.totalorder %s24, 1
      %p178 = por %p176, %p177
      %p180 = scmp.ne.s32.totalorder %s165, %s179
      %p181 = scmp.eq.s32.totalorder %s24, 0
      %p182 = por %p180, %p181
      %s184 = sadd.s32 %s183, 1
      %p187 = scmp.eq.s32.totalorder %s18, 1
      %p188 = scmp.ne.s32.totalorder %s183, %s185
      %p189 = scmp.eq.s32.totalorder %s18, 0
      %p190 = por %p188, %p189
      %p191 = scmp.ne.s32.totalorder %s183, %s185
      %p192 = scmp.eq.s32.totalorder %s23, 1
      %p193 = por %p191, %p192
      %p194 = scmp.ne.s32.totalorder %s185, %s186
      %p195 = scmp.eq.s32.totalorder %s23, 0
      %p196 = por %p194, %p195
      %p197 = scmp.ne.s32.totalorder %s185, %s186
      %p198 = scmp.eq.s32.totalorder %s24, 1
      %p199 = por %p197, %p198
      %p201 = scmp.ne.s32.totalorder %s186, %s200
      %p202 = scmp.eq.s32.totalorder %s24, 0
      %p203 = por %p201, %p202
      %s205 = sadd.s32 %s204, 1
      %p208 = scmp.eq.s32.totalorder %s18, 1
      %p209 = scmp.ne.s32.totalorder %s204, %s206
      %p210 = scmp.eq.s32.totalorder %s18, 0
      %p211 = por %p209, %p210
      %p212 = scmp.ne.s32.totalorder %s204, %s206
      %p213 = scmp.eq.s32.totalorder %s23, 1
      %p214 = por %p212, %p213
      %p215 = scmp.ne.s32.totalorder %s206, %s207
      %p216 = scmp.eq.s32.totalorder %s23, 0
      %p217 = por %p215, %p216
      %p218 = scmp.ne.s32.totalorder %s206, %s207
      %p219 = scmp.eq.s32.totalorder %s24, 1
      %p220 = por %p218, %p219
      %p222 = scmp.ne.s32.totalorder %s207, %s221
      %p223 = scmp.eq.s32.totalorder %s24, 0
      %p224 = por %p222, %p223
      %s225 = ssub.s32 %s18, %s25
      %p226 = scmp.eq.s32.totalorder %s225, 0
      %s228 = sadd.s32 %s227, 1
      %s229 = scalar_select %p226, %s227, %s228
      %p232 = pneg %p226
      %p233 = scmp.eq.s32.totalorder %s18, 1
      %p234 = por %p232, %p233
      %p235 = scmp.ne.s32.totalorder %s227, %s230
      %p236 = scmp.eq.s32.totalorder %s18, 0
      %p237 = por %p235, %p236
      %p238 = scmp.ne.s32.totalorder %s227, %s230
      %p239 = scmp.eq.s32.totalorder %s23, 1
      %p240 = por %p238, %p239
      %p241 = scmp.ne.s32.totalorder %s230, %s231
      %p242 = scmp.eq.s32.totalorder %s23, 0
      %p243 = por %p241, %p242
      %p244 = scmp.ne.s32.totalorder %s230, %s231
      %p245 = scmp.eq.s32.totalorder %s24, 1
      %p246 = por %p244, %p245
      %p248 = scmp.ne.s32.totalorder %s231, %s247
      %p249 = scmp.eq.s32.totalorder %s24, 0
      %p250 = por %p248, %p249
      %p251 = scmp.le.s32.totalorder 1, %s18
      %p252 = scmp.lt.s32.totalorder %s18, 3
      %p253 = pnand %p251, %p252
      %p254 = pneg %p253
      // Predicated region
      $region9: #{encoder_layer.1} parent=5 // pred_check
        _
      $region10: #{encoder_layer.1} parent=5 // pred_check_branch
        %256 = sbr.rel (%p253) target = $region12
      $region11: #{encoder_layer.1} parent=5 // pred_region
        %s257 = ssub.s32 %s18, 1
        // Predicated region
        $region13: #{encoder_layer.1} parent=11 // pred_check
          %p258 = pneg %p91
        $region14: #{encoder_layer.1} parent=11 // pred_check_branch
          %260 = sbr.rel (%p258) target = $region16
        $region15: #{encoder_layer.1} parent=11 // pred_region
          _
        $region16: #{encoder_layer.1} parent=11 // pred_fallthru
          _
        // Predicated region
        $region17: #{encoder_layer.1} parent=11 // pred_check
          %p261 = pneg %p112
        $region18: #{encoder_layer.1} parent=11 // pred_check_branch
          %263 = sbr.rel (%p261) target = $region20
        $region19: #{encoder_layer.1} parent=11 // pred_region
          _
        $region20: #{encoder_layer.1} parent=11 // pred_fallthru
          _
        // Predicated region
        $region21: #{encoder_layer.1} parent=11 // pred_check
          %p264 = pneg %p133
        $region22: #{encoder_layer.1} parent=11 // pred_check_branch
          %266 = sbr.rel (%p264) target = $region24
        $region23: #{encoder_layer.1} parent=11 // pred_region
          _
        $region24: #{encoder_layer.1} parent=11 // pred_fallthru
          _
        // Predicated region
        $region25: #{encoder_layer.1} parent=11 // pred_check
          %p267 = pneg %p154
        $region26: #{encoder_layer.1} parent=11 // pred_check_branch
          %269 = sbr.rel (%p267) target = $region28
        $region27: #{encoder_layer.1} parent=11 // pred_region
          _
        $region28: #{encoder_layer.1} parent=11 // pred_fallthru
          _
        // Predicated region
        $region29: #{encoder_layer.1} parent=11 // pred_check
          %p270 = pneg %p175
        $region30: #{encoder_layer.1} parent=11 // pred_check_branch
          %272 = sbr.rel (%p270) target = $region32
        $region31: #{encoder_layer.1} parent=11 // pred_region
          _
        $region32: #{encoder_layer.1} parent=11 // pred_fallthru
          _
        // Predicated region
        $region33: #{encoder_layer.1} parent=11 // pred_check
          %p273 = pneg %p196
        $region34: #{encoder_layer.1} parent=11 // pred_check_branch
          %275 = sbr.rel (%p273) target = $region36
        $region35: #{encoder_layer.1} parent=11 // pred_region
          _
        $region36: #{encoder_layer.1} parent=11 // pred_fallthru
          _
        // Predicated region
        $region37: #{encoder_layer.1} parent=11 // pred_check
          %p276 = pneg %p217
        $region38: #{encoder_layer.1} parent=11 // pred_check_branch
          %278 = sbr.rel (%p276) target = $region40
        $region39: #{encoder_layer.1} parent=11 // pred_region
          _
        $region40: #{encoder_layer.1} parent=11 // pred_fallthru
          _
      $region12: #{encoder_layer.1} parent=5 // pred_fallthru
        _
      %p279 = scmp.lt.s32.totalorder %s18, 2
      // Predicated region
      $region41: #{encoder_layer.1} parent=5 // pred_check
        %p280 = pneg %p279
      $region42: #{encoder_layer.1} parent=5 // pred_check_branch
        %282 = sbr.rel (%p280) target = $region44
      $region43: #{encoder_layer.1} parent=5 // pred_region
        // Predicated region
        $region45: #{encoder_layer.1} parent=43 // pred_check
          %p283 = pneg %p38
        $region46: #{encoder_layer.1} parent=43 // pred_check_branch
          %285 = sbr.rel (%p283) target = $region48
        $region47: #{encoder_layer.1} parent=43 // pred_region
          %p286 = scmp.lt.s32.totalorder %s18, 1
          %s287 = scalar_select %p286, %s18, 1
          %s288 = smul.addr %s287, 8
          %s289 = scalar_lea.vmem %s0, %s288
        $region48: #{encoder_layer.1} parent=43 // pred_fallthru
          _
        // Predicated region
        $region49: #{encoder_layer.1} parent=43 // pred_check
          %p290 = pneg %p64
        $region50: #{encoder_layer.1} parent=43 // pred_check_branch
          %292 = sbr.rel (%p290) target = $region52
        $region51: #{encoder_layer.1} parent=43 // pred_region
          %p293 = scmp.lt.s32.totalorder %s18, 1
          %s294 = scalar_select %p293, %s18, 1
          %s295 = smul.addr %s294, 8
          %s296 = scalar_lea.vmem %s1, %s295
        $region52: #{encoder_layer.1} parent=43 // pred_fallthru
          _
      $region44: #{encoder_layer.1} parent=5 // pred_fallthru
        _
      %p297 = scmp.le.s32.totalorder 1, %s18
      %p298 = scmp.lt.s32.totalorder %s18, 3
      %p299 = pnand %p297, %p298
      %p300 = pneg %p299
      // Predicated region
      $region53: #{encoder_layer.1} parent=5 // pred_check
        _
      $region54: #{encoder_layer.1} parent=5 // pred_check_branch
        %302 = sbr.rel (%p299) target = $region56
      $region55: #{encoder_layer.1} parent=5 // pred_region
        %s303 = ssub.s32 %s18, 1
        %p304 = scmp.lt.s32.totalorder %s23, 1
        %s305 = scalar_select %p304, %s23, 1
        %s306 = smul.addr %s305, 8
        %s307 = scalar_lea.vmem %s0, %s306
        %p308 = pneg %p44
        %p309 = pneg %p41
        %p310 = scmp.lt.s32.totalorder %s23, 1
        %s311 = scalar_select %p310, %s23, 1
        %s312 = smul.addr %s311, 8
        %s313 = scalar_lea.vmem %s1, %s312
        %p314 = pneg %p70
        %p315 = pneg %p67
        %p316 = pneg %p91
        %p317 = pneg %p88
        %p318 = pneg %p112
        %p319 = pneg %p109
        %p320 = pneg %p133
        %p321 = pneg %p130
        %p322 = pneg %p154
        %p323 = pneg %p151
        %p324 = pneg %p175
        %p325 = pneg %p172
        %p326 = pneg %p196
        %p327 = pneg %p193
        %p328 = pneg %p217
        %p329 = pneg %p214
        %p330 = pneg %p243
        %p331 = pneg %p240
        %s332 = sand.u32 %s230, 1
        %s333 = scalar_lea.sflag [#allocation3], %s332
        %s334 = sand.u32 %s230, 1
        %s335 = smul.addr %s334, 8
        %s336 = scalar_lea.vmem [#allocation2], %s335
        %p337 = scmp.lt.s32.totalorder %s23, 1
        %s338 = scalar_select %p337, %s23, 1
        %s339 = smul.addr %s338, 8
        %s340 = scalar_lea.vmem %s0, %s339
        %p341 = scmp.lt.s32.totalorder %s23, 1
        %s342 = scalar_select %p341, %s23, 1
        %s343 = smul.addr %s342, 8
        %s344 = scalar_lea.vmem %s1, %s343
        %v345 = vld [vmem:[%s340] sm:$0xff]
        %v346 = vld [vmem:[%s344] sm:$0xff]
        %v347 = vld [vmem:[%s2] sm:$0xff]
        %v348 = vld [vmem:[%s3] sm:$0x1]
        %v349 = vlaneseq
        %v350 = vshrl.u32 %v349, 7
        %v351 = vsub.s32 0, %v350
        %v352 = vrot.slane %v348, %v351
        %vm353 = vcmask 261120
        %v355 = vsel %vm353, %v345, 0
        %v358 = vsel %vm353, %v347, 0
        %360 = vmatprep.subr.mxu0 0.0
        %361 = vmatpush1.xpose.msra.mxu0 %v358
        %362 = vmatprep.subr.mxu0 0.0
        %363 = vmatpush1.xpose.msra.mxu0 0.0
        %364 = vmatprep.subr.mxu0 0.0
        %365 = vmatpush1.xpose.msra.mxu0 0.0
        %366 = vmatprep.subr.mxu0 0.0
        %367 = vmatpush1.xpose.msra.mxu0 0.0
        %368 = vmatprep.subr.mxu0 0.0
        %369 = vmatpush1.xpose.msra.mxu0 0.0
        %370 = vmatprep.subr.mxu0 0.0
        %371 = vmatpush1.xpose.msra.mxu0 0.0
        %372 = vmatprep.subr.mxu0 0.0
        %373 = vmatpush1.xpose.msra.mxu0 0.0
        %374 = vmatprep.subr.mxu0 0.0
        %375 = vmatpush1.xpose.msra.mxu0 0.0
        %376 = vmatprep.subr.mxu0 0.0
        %377 = vmatpush1.xpose.msra.mxu0 0.0
        %378 = vmatprep.subr.mxu0 0.0
        %379 = vmatpush1.xpose.msra.mxu0 0.0
        %380 = vmatprep.subr.mxu0 0.0
        %381 = vmatpush1.xpose.msra.mxu0 0.0
        %382 = vmatprep.subr.mxu0 0.0
        %383 = vmatpush1.xpose.msra.mxu0 0.0
        %384 = vmatprep.subr.mxu0 0.0
        %385 = vmatpush1.xpose.msra.mxu0 0.0
        %386 = vmatprep.subr.mxu0 0.0
        %387 = vmatpush1.xpose.msra.mxu0 0.0
        %388 = vmatprep.subr.mxu0 0.0
        %389 = vmatpush1.xpose.msra.mxu0 0.0
        %390 = vmatprep.subr.mxu0 0.0
        %391 = vmatpush1.xpose.msra.mxu0 0.0
        %392 = vmatprep.subr.mxu0 0.0
        %393 = vmatpush1.xpose.msra.mxu0 0.0
        %394 = vmatprep.subr.mxu0 0.0
        %395 = vmatpush1.xpose.msra.mxu0 0.0
        %396 = vmatprep.subr.mxu0 0.0
        %397 = vmatpush1.xpose.msra.mxu0 0.0
        %398 = vmatprep.subr.mxu0 0.0
        %399 = vmatpush1.xpose.msra.mxu0 0.0
        %400 = vmatprep.subr.mxu0 0.0
        %401 = vmatpush1.xpose.msra.mxu0 0.0
        %402 = vmatprep.subr.mxu0 0.0
        %403 = vmatpush1.xpose.msra.mxu0 0.0
        %404 = vmatprep.subr.mxu0 0.0
        %405 = vmatpush1.xpose.msra.mxu0 0.0
        %406 = vmatprep.subr.mxu0 0.0
        %407 = vmatpush1.xpose.msra.mxu0 0.0
        %408 = vmatprep.subr.mxu0 0.0
        %409 = vmatpush1.xpose.msra.mxu0 0.0
        %410 = vmatprep.subr.mxu0 0.0
        %411 = vmatpush1.xpose.msra.mxu0 0.0
        %412 = vmatprep.subr.mxu0 0.0
        %413 = vmatpush1.xpose.msra.mxu0 0.0
        %414 = vmatprep.subr.mxu0 0.0
        %415 = vmatpush1.xpose.msra.mxu0 0.0
        %416 = vmatprep.subr.mxu0 0.0
        %417 = vmatpush1.xpose.msra.mxu0 0.0
        %418 = vmatprep.subr.mxu0 0.0
        %419 = vmatpush1.xpose.msra.mxu0 0.0
        %420 = vmatprep.subr.mxu0 0.0
        %421 = vmatpush1.xpose.msra.mxu0 0.0
        %422 = vmatprep.subr.mxu0 0.0
        %423 = vmatpush1.xpose.msra.mxu0 0.0
        %424 = vmatprep.mubr.f32.mxu0 0.0
        %425 = vmatmul.mubr.f32.gmra.mrb[0].mxu0 %v355
        %v426 = vpop.f32.mrb[0].mxu0
        %v427 = vadd.f32 %v352, %v426
        %v428 = vpop.f32.mrb[0].mxu0
        %429 = vdwg.mxu0
        %s430 = scalar_lea.vmem %s2, 32
        %v431 = vld [vmem:[%s430] sm:$0xff]
        %v432 = vld [vmem:[%s3 + $0x4] sm:$0x1]
        %v433 = vlaneseq
        %v434 = vshrl.u32 %v433, 7
        %v435 = vsub.s32 0, %v434
        %v436 = vrot.slane %v432, %v435
        %v438 = vsel %vm353, %v431, 0
        %440 = vmatprep.subr.mxu0 0.0
        %441 = vmatpush1.xpose.msra.mxu0 %v438
        %442 = vmatprep.subr.mxu0 0.0
        %443 = vmatpush1.xpose.msra.mxu0 0.0
        %444 = vmatprep.subr.mxu0 0.0
        %445 = vmatpush1.xpose.msra.mxu0 0.0
        %446 = vmatprep.subr.mxu0 0.0
        %447 = vmatpush1.xpose.msra.mxu0 0.0
        %448 = vmatprep.subr.mxu0 0.0
        %449 = vmatpush1.xpose.msra.mxu0 0.0
        %450 = vmatprep.subr.mxu0 0.0
        %451 = vmatpush1.xpose.msra.mxu0 0.0
        %452 = vmatprep.subr.mxu0 0.0
        %453 = vmatpush1.xpose.msra.mxu0 0.0
        %454 = vmatprep.subr.mxu0 0.0
        %455 = vmatpush1.xpose.msra.mxu0 0.0
        %456 = vmatprep.subr.mxu0 0.0
        %457 = vmatpush1.xpose.msra.mxu0 0.0
        %458 = vmatprep.subr.mxu0 0.0
        %459 = vmatpush1.xpose.msra.mxu0 0.0
        %460 = vmatprep.subr.mxu0 0.0
        %461 = vmatpush1.xpose.msra.mxu0 0.0
        %462 = vmatprep.subr.mxu0 0.0
        %463 = vmatpush1.xpose.msra.mxu0 0.0
        %464 = vmatprep.subr.mxu0 0.0
        %465 = vmatpush1.xpose.msra.mxu0 0.0
        %466 = vmatprep.subr.mxu0 0.0
        %467 = vmatpush1.xpose.msra.mxu0 0.0
        %468 = vmatprep.subr.mxu0 0.0
        %469 = vmatpush1.xpose.msra.mxu0 0.0
        %470 = vmatprep.subr.mxu0 0.0
        %471 = vmatpush1.xpose.msra.mxu0 0.0
        %472 = vmatprep.subr.mxu0 0.0
        %473 = vmatpush1.xpose.msra.mxu0 0.0
        %474 = vmatprep.subr.mxu0 0.0
        %475 = vmatpush1.xpose.msra.mxu0 0.0
        %476 = vmatprep.subr.mxu0 0.0
        %477 = vmatpush1.xpose.msra.mxu0 0.0
        %478 = vmatprep.subr.mxu0 0.0
        %479 = vmatpush1.xpose.msra.mxu0 0.0
        %480 = vmatprep.subr.mxu0 0.0
        %481 = vmatpush1.xpose.msra.mxu0 0.0
        %482 = vmatprep.subr.mxu0 0.0
        %483 = vmatpush1.xpose.msra.mxu0 0.0
        %484 = vmatprep.subr.mxu0 0.0
        %485 = vmatpush1.xpose.msra.mxu0 0.0
        %486 = vmatprep.subr.mxu0 0.0
        %487 = vmatpush1.xpose.msra.mxu0 0.0
        %488 = vmatprep.subr.mxu0 0.0
        %489 = vmatpush1.xpose.msra.mxu0 0.0
        %490 = vmatprep.subr.mxu0 0.0
        %491 = vmatpush1.xpose.msra.mxu0 0.0
        %492 = vmatprep.subr.mxu0 0.0
        %493 = vmatpush1.xpose.msra.mxu0 0.0
        %494 = vmatprep.subr.mxu0 0.0
        %495 = vmatpush1.xpose.msra.mxu0 0.0
        %496 = vmatprep.subr.mxu0 0.0
        %497 = vmatpush1.xpose.msra.mxu0 0.0
        %498 = vmatprep.subr.mxu0 0.0
        %499 = vmatpush1.xpose.msra.mxu0 0.0
        %500 = vmatprep.subr.mxu0 0.0
        %501 = vmatpush1.xpose.msra.mxu0 0.0
        %502 = vmatprep.subr.mxu0 0.0
        %503 = vmatpush1.xpose.msra.mxu0 0.0
        %504 = vmatprep.mubr.f32.mxu0 0.0
        %505 = vmatmul.mubr.f32.gmra.mrb[0].mxu0 %v355
        %v506 = vpop.f32.mrb[0].mxu0
        %v507 = vadd.f32 %v436, %v506
        %v508 = vpop.f32.mrb[0].mxu0
        %509 = vdwg.mxu0
        %s510 = scalar_lea.vmem %s2, 64
        %v511 = vld [vmem:[%s510] sm:$0xff]
        %v512 = vld [vmem:[%s3 + $0x8] sm:$0x1]
        %v513 = vlaneseq
        %v514 = vshrl.u32 %v513, 7
        %v515 = vsub.s32 0, %v514
        %v516 = vrot.slane %v512, %v515
        %v518 = vsel %vm353, %v511, 0
        %520 = vmatprep.subr.mxu0 0.0
        %521 = vmatpush1.xpose.msra.mxu0 %v518
        %522 = vmatprep.subr.mxu0 0.0
        %523 = vmatpush1.xpose.msra.mxu0 0.0
        %524 = vmatprep.subr.mxu0 0.0
        %525 = vmatpush1.xpose.msra.mxu0 0.0
        %526 = vmatprep.subr.mxu0 0.0
        %527 = vmatpush1.xpose.msra.mxu0 0.0
        %528 = vmatprep.subr.mxu0 0.0
        %529 = vmatpush1.xpose.msra.mxu0 0.0
        %530 = vmatprep.subr.mxu0 0.0
        %531 = vmatpush1.xpose.msra.mxu0 0.0
        %532 = vmatprep.subr.mxu0 0.0
        %533 = vmatpush1.xpose.msra.mxu0 0.0
        %534 = vmatprep.subr.mxu0 0.0
        %535 = vmatpush1.xpose.msra.mxu0 0.0
        %536 = vmatprep.subr.mxu0 0.0
        %537 = vmatpush1.xpose.msra.mxu0 0.0
        %538 = vmatprep.subr.mxu0 0.0
        %539 = vmatpush1.xpose.msra.mxu0 0.0
        %540 = vmatprep.subr.mxu0 0.0
        %541 = vmatpush1.xpose.msra.mxu0 0.0
        %542 = vmatprep.subr.mxu0 0.0
        %543 = vmatpush1.xpose.msra.mxu0 0.0
        %544 = vmatprep.subr.mxu0 0.0
        %545 = vmatpush1.xpose.msra.mxu0 0.0
        %546 = vmatprep.subr.mxu0 0.0
        %547 = vmatpush1.xpose.msra.mxu0 0.0
        %548 = vmatprep.subr.mxu0 0.0
        %549 = vmatpush1.xpose.msra.mxu0 0.0
        %550 = vmatprep.subr.mxu0 0.0
        %551 = vmatpush1.xpose.msra.mxu0 0.0
        %552 = vmatprep.subr.mxu0 0.0
        %553 = vmatpush1.xpose.msra.mxu0 0.0
        %554 = vmatprep.subr.mxu0 0.0
        %555 = vmatpush1.xpose.msra.mxu0 0.0
        %556 = vmatprep.subr.mxu0 0.0
        %557 = vmatpush1.xpose.msra.mxu0 0.0
        %558 = vmatprep.subr.mxu0 0.0
        %559 = vmatpush1.xpose.msra.mxu0 0.0
        %560 = vmatprep.subr.mxu0 0.0
        %561 = vmatpush1.xpose.msra.mxu0 0.0
        %562 = vmatprep.subr.mxu0 0.0
        %563 = vmatpush1.xpose.msra.mxu0 0.0
        %564 = vmatprep.subr.mxu0 0.0
        %565 = vmatpush1.xpose.msra.mxu0 0.0
        %566 = vmatprep.subr.mxu0 0.0
        %567 = vmatpush1.xpose.msra.mxu0 0.0
        %568 = vmatprep.subr.mxu0 0.0
        %569 = vmatpush1.xpose.msra.mxu0 0.0
        %570 = vmatprep.subr.mxu0 0.0
        %571 = vmatpush1.xpose.msra.mxu0 0.0
        %572 = vmatprep.subr.mxu0 0.0
        %573 = vmatpush1.xpose.msra.mxu0 0.0
        %574 = vmatprep.subr.mxu0 0.0
        %575 = vmatpush1.xpose.msra.mxu0 0.0
        %576 = vmatprep.subr.mxu0 0.0
        %577 = vmatpush1.xpose.msra.mxu0 0.0
        %578 = vmatprep.subr.mxu0 0.0
        %579 = vmatpush1.xpose.msra.mxu0 0.0
        %580 = vmatprep.subr.mxu0 0.0
        %581 = vmatpush1.xpose.msra.mxu0 0.0
        %582 = vmatprep.subr.mxu0 0.0
        %583 = vmatpush1.xpose.msra.mxu0 0.0
        %584 = vmatprep.mubr.f32.mxu0 0.0
        %585 = vmatmul.mubr.f32.gmra.mrb[0].mxu0 %v355
        %v586 = vpop.f32.mrb[0].mxu0
        %v587 = vadd.f32 %v516, %v586
        %v588 = vpop.f32.mrb[0].mxu0
        %589 = vdwg.mxu0
        %vm590 = vcmask 64512
        %v592 = vsel %vm590, %v427, 0
        %v595 = vsel %vm590, %v507, 0
        %597 = vmatprep.subr.mxu0 0.0
        %598 = vmatpush1.xpose.msra.mxu0 %v595
        %599 = vmatprep.subr.mxu0 0.0
        %600 = vmatpush1.xpose.msra.mxu0 0.0
        %601 = vmatprep.subr.mxu0 0.0
        %602 = vmatpush1.xpose.msra.mxu0 0.0
        %603 = vmatprep.subr.mxu0 0.0
        %604 = vmatpush1.xpose.msra.mxu0 0.0
        %605 = vmatprep.subr.mxu0 0.0
        %606 = vmatpush1.xpose.msra.mxu0 0.0
        %607 = vmatprep.subr.mxu0 0.0
        %608 = vmatpush1.xpose.msra.mxu0 0.0
        %609 = vmatprep.subr.mxu0 0.0
        %610 = vmatpush1.xpose.msra.mxu0 0.0
        %611 = vmatprep.subr.mxu0 0.0
        %612 = vmatpush1.xpose.msra.mxu0 0.0
        %613 = vmatprep.subr.mxu0 0.0
        %614 = vmatpush1.xpose.msra.mxu0 0.0
        %615 = vmatprep.subr.mxu0 0.0
        %616 = vmatpush1.xpose.msra.mxu0 0.0
        %617 = vmatprep.subr.mxu0 0.0
        %618 = vmatpush1.xpose.msra.mxu0 0.0
        %619 = vmatprep.subr.mxu0 0.0
        %620 = vmatpush1.xpose.msra.mxu0 0.0
        %621 = vmatprep.subr.mxu0 0.0
        %622 = vmatpush1.xpose.msra.mxu0 0.0
        %623 = vmatprep.subr.mxu0 0.0
        %624 = vmatpush1.xpose.msra.mxu0 0.0
        %625 = vmatprep.subr.mxu0 0.0
        %626 = vmatpush1.xpose.msra.mxu0 0.0
        %627 = vmatprep.subr.mxu0 0.0
        %628 = vmatpush1.xpose.msra.mxu0 0.0
        %629 = vmatprep.subr.mxu0 0.0
        %630 = vmatpush1.xpose.msra.mxu0 0.0
        %631 = vmatprep.subr.mxu0 0.0
        %632 = vmatpush1.xpose.msra.mxu0 0.0
        %633 = vmatprep.subr.mxu0 0.0
        %634 = vmatpush1.xpose.msra.mxu0 0.0
        %635 = vmatprep.subr.mxu0 0.0
        %636 = vmatpush1.xpose.msra.mxu0 0.0
        %637 = vmatprep.subr.mxu0 0.0
        %638 = vmatpush1.xpose.msra.mxu0 0.0
        %639 = vmatprep.subr.mxu0 0.0
        %640 = vmatpush1.xpose.msra.mxu0 0.0
        %641 = vmatprep.subr.mxu0 0.0
        %642 = vmatpush1.xpose.msra.mxu0 0.0
        %643 = vmatprep.subr.mxu0 0.0
        %644 = vmatpush1.xpose.msra.mxu0 0.0
        %645 = vmatprep.subr.mxu0 0.0
        %646 = vmatpush1.xpose.msra.mxu0 0.0
        %647 = vmatprep.subr.mxu0 0.0
        %648 = vmatpush1.xpose.msra.mxu0 0.0
        %649 = vmatprep.subr.mxu0 0.0
        %650 = vmatpush1.xpose.msra.mxu0 0.0
        %651 = vmatprep.subr.mxu0 0.0
        %652 = vmatpush1.xpose.msra.mxu0 0.0
        %653 = vmatprep.subr.mxu0 0.0
        %654 = vmatpush1.xpose.msra.mxu0 0.0
        %655 = vmatprep.subr.mxu0 0.0
        %656 = vmatpush1.xpose.msra.mxu0 0.0
        %657 = vmatprep.subr.mxu0 0.0
        %658 = vmatpush1.xpose.msra.mxu0 0.0
        %659 = vmatprep.subr.mxu0 0.0
        %660 = vmatpush1.xpose.msra.mxu0 0.0
        %661 = vmatprep.mubr.f32.mxu0 0.0
        %662 = vmatmul.mubr.f32.gmra.mrb[0].mxu0 %v592
        %v663 = vpop.f32.mrb[0].mxu0
        %v664 = vadd.f32 %v346, %v663
        %v665 = vpop.f32.mrb[0].mxu0
        %666 = vdwg.mxu0
        %v667 = vsel %vm590, %v664, -inf
        %668 = vmax.xlane.f32.xlu0 %v667
        %v669 = vpop.xlane.xlu0 %668
        %v670 = vsub.f32 %v664, %v669
        %v671 = vmul.f32 %v670, 1.442695
        %v672 = vpow.pop %v671
        %v673 = vsel %vm590, %v672, 0.0
        %674 = vadd.xlane.f32.xlu0 %v673
        %v675 = vpop.xlane.xlu0 %674
        %v676 = vrcp.pop %v675
        %v677 = vmul.f32 %v672, %v676
        %v679 = vsel %vm590, %v677, 0
        %681 = vmatprep.subr.mxu0 0.0
        %682 = vmatpush1.msra.mxu0 %v587
        %683 = vmatprep.subr.mxu0 0.0
        %684 = vmatpush1.msra.mxu0 0.0
        %685 = vmatprep.subr.mxu0 0.0
        %686 = vmatpush1.msra.mxu0 0.0
        %687 = vmatprep.subr.mxu0 0.0
        %688 = vmatpush1.msra.mxu0 0.0
        %689 = vmatprep.subr.mxu0 0.0
        %690 = vmatpush1.msra.mxu0 0.0
        %691 = vmatprep.subr.mxu0 0.0
        %692 = vmatpush1.msra.mxu0 0.0
        %693 = vmatprep.subr.mxu0 0.0
        %694 = vmatpush1.msra.mxu0 0.0
        %695 = vmatprep.subr.mxu0 0.0
        %696 = vmatpush1.msra.mxu0 0.0
        %697 = vmatprep.subr.mxu0 0.0
        %698 = vmatpush1.msra.mxu0 0.0
        %699 = vmatprep.subr.mxu0 0.0
        %700 = vmatpush1.msra.mxu0 0.0
        %701 = vmatprep.subr.mxu0 0.0
        %702 = vmatpush1.msra.mxu0 0.0
        %703 = vmatprep.subr.mxu0 0.0
        %704 = vmatpush1.msra.mxu0 0.0
        %705 = vmatprep.subr.mxu0 0.0
        %706 = vmatpush1.msra.mxu0 0.0
        %707 = vmatprep.subr.mxu0 0.0
        %708 = vmatpush1.msra.mxu0 0.0
        %709 = vmatprep.subr.mxu0 0.0
        %710 = vmatpush1.msra.mxu0 0.0
        %711 = vmatprep.subr.mxu0 0.0
        %712 = vmatpush1.msra.mxu0 0.0
        %713 = vmatprep.subr.mxu0 0.0
        %714 = vmatpush1.msra.mxu0 0.0
        %715 = vmatprep.subr.mxu0 0.0
        %716 = vmatpush1.msra.mxu0 0.0
        %717 = vmatprep.subr.mxu0 0.0
        %718 = vmatpush1.msra.mxu0 0.0
        %719 = vmatprep.subr.mxu0 0.0
        %720 = vmatpush1.msra.mxu0 0.0
        %721 = vmatprep.subr.mxu0 0.0
        %722 = vmatpush1.msra.mxu0 0.0
        %723 = vmatprep.subr.mxu0 0.0
        %724 = vmatpush1.msra.mxu0 0.0
        %725 = vmatprep.subr.mxu0 0.0
        %726 = vmatpush1.msra.mxu0 0.0
        %727 = vmatprep.subr.mxu0 0.0
        %728 = vmatpush1.msra.mxu0 0.0
        %729 = vmatprep.subr.mxu0 0.0
        %730 = vmatpush1.msra.mxu0 0.0
        %731 = vmatprep.subr.mxu0 0.0
        %732 = vmatpush1.msra.mxu0 0.0
        %733 = vmatprep.subr.mxu0 0.0
        %734 = vmatpush1.msra.mxu0 0.0
        %735 = vmatprep.subr.mxu0 0.0
        %736 = vmatpush1.msra.mxu0 0.0
        %737 = vmatprep.subr.mxu0 0.0
        %738 = vmatpush1.msra.mxu0 0.0
        %739 = vmatprep.subr.mxu0 0.0
        %740 = vmatpush1.msra.mxu0 0.0
        %741 = vmatprep.subr.mxu0 0.0
        %742 = vmatpush1.msra.mxu0 0.0
        %743 = vmatprep.subr.mxu0 0.0
        %744 = vmatpush1.msra.mxu0 0.0
        %745 = vmatprep.mubr.f32.mxu0 0.0
        %746 = vmatmul.mubr.f32.gmra.mrb[0].mxu0 %v679
        %v747 = vpop.f32.mrb[0].mxu0
        %v748 = vadd.f32 0.0, %v747
        %v749 = vpop.f32.mrb[0].mxu0
        %750 = vdwg.mxu0
        %v751 = vld [vmem:[%s4] sm:$0xff]
        %s752 = scalar_lea.vmem %s2, 8
        %v753 = vld [vmem:[%s752] sm:$0xff]
        %v754 = vld [vmem:[%s3 + $0x1] sm:$0x1]
        %v755 = vlaneseq
        %v756 = vshrl.u32 %v755, 7
        %v757 = vsub.s32 0, %v756
        %v758 = vrot.slane %v754, %v757
        %v760 = vsel %vm353, %v753, 0
        %762 = vmatprep.subr.mxu0 0.0
        %763 = vmatpush1.xpose.msra.mxu0 %v760
        %764 = vmatprep.subr.mxu0 0.0
        %765 = vmatpush1.xpose.msra.mxu0 0.0
        %766 = vmatprep.subr.mxu0 0.0
        %767 = vmatpush1.xpose.msra.mxu0 0.0
        %768 = vmatprep.subr.mxu0 0.0
        %769 = vmatpush1.xpose.msra.mxu0 0.0
        %770 = vmatprep.subr.mxu0 0.0
        %771 = vmatpush1.xpose.msra.mxu0 0.0
        %772 = vmatprep.subr.mxu0 0.0
        %773 = vmatpush1.xpose.msra.mxu0 0.0
        %774 = vmatprep.subr.mxu0 0.0
        %775 = vmatpush1.xpose.msra.mxu0 0.0
        %776 = vmatprep.subr.mxu0 0.0
        %777 = vmatpush1.xpose.msra.mxu0 0.0
        %778 = vmatprep.subr.mxu0 0.0
        %779 = vmatpush1.xpose.msra.mxu0 0.0
        %780 = vmatprep.subr.mxu0 0.0
        %781 = vmatpush1.xpose.msra.mxu0 0.0
        %782 = vmatprep.subr.mxu0 0.0
        %783 = vmatpush1.xpose.msra.mxu0 0.0
        %784 = vmatprep.subr.mxu0 0.0
        %785 = vmatpush1.xpose.msra.mxu0 0.0
        %786 = vmatprep.subr.mxu0 0.0
        %787 = vmatpush1.xpose.msra.mxu0 0.0
        %788 = vmatprep.subr.mxu0 0.0
        %789 = vmatpush1.xpose.msra.mxu0 0.0
        %790 = vmatprep.subr.mxu0 0.0
        %791 = vmatpush1.xpose.msra.mxu0 0.0
        %792 = vmatprep.subr.mxu0 0.0
        %793 = vmatpush1.xpose.msra.mxu0 0.0
        %794 = vmatprep.subr.mxu0 0.0
        %795 = vmatpush1.xpose.msra.mxu0 0.0
        %796 = vmatprep.subr.mxu0 0.0
        %797 = vmatpush1.xpose.msra.mxu0 0.0
        %798 = vmatprep.subr.mxu0 0.0
        %799 = vmatpush1.xpose.msra.mxu0 0.0
        %800 = vmatprep.subr.mxu0 0.0
        %801 = vmatpush1.xpose.msra.mxu0 0.0
        %802 = vmatprep.subr.mxu0 0.0
        %803 = vmatpush1.xpose.msra.mxu0 0.0
        %804 = vmatprep.subr.mxu0 0.0
        %805 = vmatpush1.xpose.msra.mxu0 0.0
        %806 = vmatprep.subr.mxu0 0.0
        %807 = vmatpush1.xpose.msra.mxu0 0.0
        %808 = vmatprep.subr.mxu0 0.0
        %809 = vmatpush1.xpose.msra.mxu0 0.0
        %810 = vmatprep.subr.mxu0 0.0
        %811 = vmatpush1.xpose.msra.mxu0 0.0
        %812 = vmatprep.subr.mxu0 0.0
        %813 = vmatpush1.xpose.msra.mxu0 0.0
        %814 = vmatprep.subr.mxu0 0.0
        %815 = vmatpush1.xpose.msra.mxu0 0.0
        %816 = vmatprep.subr.mxu0 0.0
        %817 = vmatpush1.xpose.msra.mxu0 0.0
        %818 = vmatprep.subr.mxu0 0.0
        %819 = vmatpush1.xpose.msra.mxu0 0.0
        %820 = vmatprep.subr.mxu0 0.0
        %821 = vmatpush1.xpose.msra.mxu0 0.0
        %822 = vmatprep.subr.mxu0 0.0
        %823 = vmatpush1.xpose.msra.mxu0 0.0
        %824 = vmatprep.subr.mxu0 0.0
        %825 = vmatpush1.xpose.msra.mxu0 0.0
        %826 = vmatprep.mubr.f32.mxu0 0.0
        %827 = vmatmul.mubr.f32.gmra.mrb[0].mxu0 %v355
        %v828 = vpop.f32.mrb[0].mxu0
        %v829 = vadd.f32 %v758, %v828
        %v830 = vpop.f32.mrb[0].mxu0
        %831 = vdwg.mxu0
        %s832 = scalar_lea.vmem %s2, 40
        %v833 = vld [vmem:[%s832] sm:$0xff]
        %v834 = vld [vmem:[%s3 + $0x5] sm:$0x1]
        %v835 = vlaneseq
        %v836 = vshrl.u32 %v835, 7
        %v837 = vsub.s32 0, %v836
        %v838 = vrot.slane %v834, %v837
        %v840 = vsel %vm353, %v833, 0
        %842 = vmatprep.subr.mxu0 0.0
        %843 = vmatpush1.xpose.msra.mxu0 %v840
        %844 = vmatprep.subr.mxu0 0.0
        %845 = vmatpush1.xpose.msra.mxu0 0.0
        %846 = vmatprep.subr.mxu0 0.0
        %847 = vmatpush1.xpose.msra.mxu0 0.0
        %848 = vmatprep.subr.mxu0 0.0
        %849 = vmatpush1.xpose.msra.mxu0 0.0
        %850 = vmatprep.subr.mxu0 0.0
        %851 = vmatpush1.xpose.msra.mxu0 0.0
        %852 = vmatprep.subr.mxu0 0.0
        %853 = vmatpush1.xpose.msra.mxu0 0.0
        %854 = vmatprep.subr.mxu0 0.0
        %855 = vmatpush1.xpose.msra.mxu0 0.0
        %856 = vmatprep.subr.mxu0 0.0
        %857 = vmatpush1.xpose.msra.mxu0 0.0
        %858 = vmatprep.subr.mxu0 0.0
        %859 = vmatpush1.xpose.msra.mxu0 0.0
        %860 = vmatprep.subr.mxu0 0.0
        %861 = vmatpush1.xpose.msra.mxu0 0.0
        %862 = vmatprep.subr.mxu0 0.0
        %863 = vmatpush1.xpose.msra.mxu0 0.0
        %864 = vmatprep.subr.mxu0 0.0
        %865 = vmatpush1.xpose.msra.mxu0 0.0
        %866 = vmatprep.subr.mxu0 0.0
        %867 = vmatpush1.xpose.msra.mxu0 0.0
        %868 = vmatprep.subr.mxu0 0.0
        %869 = vmatpush1.xpose.msra.mxu0 0.0
        %870 = vmatprep.subr.mxu0 0.0
        %871 = vmatpush1.xpose.msra.mxu0 0.0
        %872 = vmatprep.subr.mxu0 0.0
        %873 = vmatpush1.xpose.msra.mxu0 0.0
        %874 = vmatprep.subr.mxu0 0.0
        %875 = vmatpush1.xpose.msra.mxu0 0.0
        %876 = vmatprep.subr.mxu0 0.0
        %877 = vmatpush1.xpose.msra.mxu0 0.0
        %878 = vmatprep.subr.mxu0 0.0
        %879 = vmatpush1.xpose.msra.mxu0 0.0
        %880 = vmatprep.subr.mxu0 0.0
        %881 = vmatpush1.xpose.msra.mxu0 0.0
        %882 = vmatprep.subr.mxu0 0.0
        %883 = vmatpush1.xpose.msra.mxu0 0.0
        %884 = vmatprep.subr.mxu0 0.0
        %885 = vmatpush1.xpose.msra.mxu0 0.0
        %886 = vmatprep.subr.mxu0 0.0
        %887 = vmatpush1.xpose.msra.mxu0 0.0
        %888 = vmatprep.subr.mxu0 0.0
        %889 = vmatpush1.xpose.msra.mxu0 0.0
        %890 = vmatprep.subr.mxu0 0.0
        %891 = vmatpush1.xpose.msra.mxu0 0.0
        %892 = vmatprep.subr.mxu0 0.0
        %893 = vmatpush1.xpose.msra.mxu0 0.0
        %894 = vmatprep.subr.mxu0 0.0
        %895 = vmatpush1.xpose.msra.mxu0 0.0
        %896 = vmatprep.subr.mxu0 0.0
        %897 = vmatpush1.xpose.msra.mxu0 0.0
        %898 = vmatprep.subr.mxu0 0.0
        %899 = vmatpush1.xpose.msra.mxu0 0.0
        %900 = vmatprep.subr.mxu0 0.0
        %901 = vmatpush1.xpose.msra.mxu0 0.0
        %902 = vmatprep.subr.mxu0 0.0
        %903 = vmatpush1.xpose.msra.mxu0 0.0
        %904 = vmatprep.subr.mxu0 0.0
        %905 = vmatpush1.xpose.msra.mxu0 0.0
        %906 = vmatprep.mubr.f32.mxu0 0.0
        %907 = vmatmul.mubr.f32.gmra.mrb[0].mxu0 %v355
        %v908 = vpop.f32.mrb[0].mxu0
        %v909 = vadd.f32 %v838, %v908
        %v910 = vpop.f32.mrb[0].mxu0
        %911 = vdwg.mxu0
        %s912 = scalar_lea.vmem %s2, 72
        %v913 = vld [vmem:[%s912] sm:$0xff]
        %v914 = vld [vmem:[%s3 + $0x9] sm:$0x1]
        %v915 = vlaneseq
        %v916 = vshrl.u32 %v915, 7
        %v917 = vsub.s32 0, %v916
        %v918 = vrot.slane %v914, %v917
        %v920 = vsel %vm353, %v913, 0
        %922 = vmatprep.subr.mxu0 0.0
        %923 = vmatpush1.xpose.msra.mxu0 %v920
        %924 = vmatprep.subr.mxu0 0.0
        %925 = vmatpush1.xpose.msra.mxu0 0.0
        %926 = vmatprep.subr.mxu0 0.0
        %927 = vmatpush1.xpose.msra.mxu0 0.0
        %928 = vmatprep.subr.mxu0 0.0
        %929 = vmatpush1.xpose.msra.mxu0 0.0
        %930 = vmatprep.subr.mxu0 0.0
        %931 = vmatpush1.xpose.msra.mxu0 0.0
        %932 = vmatprep.subr.mxu0 0.0
        %933 = vmatpush1.xpose.msra.mxu0 0.0
        %934 = vmatprep.subr.mxu0 0.0
        %935 = vmatpush1.xpose.msra.mxu0 0.0
        %936 = vmatprep.subr.mxu0 0.0
        %937 = vmatpush1.xpose.msra.mxu0 0.0
        %938 = vmatprep.subr.mxu0 0.0
        %939 = vmatpush1.xpose.msra.mxu0 0.0
        %940 = vmatprep.subr.mxu0 0.0
        %941 = vmatpush1.xpose.msra.mxu0 0.0
        %942 = vmatprep.subr.mxu0 0.0
        %943 = vmatpush1.xpose.msra.mxu0 0.0
        %944 = vmatprep.subr.mxu0 0.0
        %945 = vmatpush1.xpose.msra.mxu0 0.0
        %946 = vmatprep.subr.mxu0 0.0
        %947 = vmatpush1.xpose.msra.mxu0 0.0
        %948 = vmatprep.subr.mxu0 0.0
        %949 = vmatpush1.xpose.msra.mxu0 0.0
        %950 = vmatprep.subr.mxu0 0.0
        %951 = vmatpush1.xpose.msra.mxu0 0.0
        %952 = vmatprep.subr.mxu0 0.0
        %953 = vmatpush1.xpose.msra.mxu0 0.0
        %954 = vmatprep.subr.mxu0 0.0
        %955 = vmatpush1.xpose.msra.mxu0 0.0
        %956 = vmatprep.subr.mxu0 0.0
        %957 = vmatpush1.xpose.msra.mxu0 0.0
        %958 = vmatprep.subr.mxu0 0.0
        %959 = vmatpush1.xpose.msra.mxu0 0.0
        %960 = vmatprep.subr.mxu0 0.0
        %961 = vmatpush1.xpose.msra.mxu0 0.0
        %962 = vmatprep.subr.mxu0 0.0
        %963 = vmatpush1.xpose.msra.mxu0 0.0
        %964 = vmatprep.subr.mxu0 0.0
        %965 = vmatpush1.xpose.msra.mxu0 0.0
        %966 = vmatprep.subr.mxu0 0.0
        %967 = vmatpush1.xpose.msra.mxu0 0.0
        %968 = vmatprep.subr.mxu0 0.0
        %969 = vmatpush1.xpose.msra.mxu0 0.0
        %970 = vmatprep.subr.mxu0 0.0
        %971 = vmatpush1.xpose.msra.mxu0 0.0
        %972 = vmatprep.subr.mxu0 0.0
        %973 = vmatpush1.xpose.msra.mxu0 0.0
        %974 = vmatprep.subr.mxu0 0.0
        %975 = vmatpush1.xpose.msra.mxu0 0.0
        %976 = vmatprep.subr.mxu0 0.0
        %977 = vmatpush1.xpose.msra.mxu0 0.0
        %978 = vmatprep.subr.mxu0 0.0
        %979 = vmatpush1.xpose.msra.mxu0 0.0
        %980 = vmatprep.subr.mxu0 0.0
        %981 = vmatpush1.xpose.msra.mxu0 0.0
        %982 = vmatprep.subr.mxu0 0.0
        %983 = vmatpush1.xpose.msra.mxu0 0.0
        %984 = vmatprep.subr.mxu0 0.0
        %985 = vmatpush1.xpose.msra.mxu0 0.0
        %986 = vmatprep.mubr.f32.mxu0 0.0
        %987 = vmatmul.mubr.f32.gmra.mrb[0].mxu0 %v355
        %v988 = vpop.f32.mrb[0].mxu0
        %v989 = vadd.f32 %v918, %v988
        %v990 = vpop.f32.mrb[0].mxu0
        %991 = vdwg.mxu0
        %v993 = vsel %vm590, %v829, 0
        %v996 = vsel %vm590, %v909, 0
        %998 = vmatprep.subr.mxu0 0.0
        %999 = vmatpush1.xpose.msra.mxu0 %v996
        %1000 = vmatprep.subr.mxu0 0.0
        %1001 = vmatpush1.xpose.msra.mxu0 0.0
        %1002 = vmatprep.subr.mxu0 0.0
        %1003 = vmatpush1.xpose.msra.mxu0 0.0
        %1004 = vmatprep.subr.mxu0 0.0
        %1005 = vmatpush1.xpose.msra.mxu0 0.0
        %1006 = vmatprep.subr.mxu0 0.0
        %1007 = vmatpush1.xpose.msra.mxu0 0.0
        %1008 = vmatprep.subr.mxu0 0.0
        %1009 = vmatpush1.xpose.msra.mxu0 0.0
        %1010 = vmatprep.subr.mxu0 0.0
        %1011 = vmatpush1.xpose.msra.mxu0 0.0
        %1012 = vmatprep.subr.mxu0 0.0
        %1013 = vmatpush1.xpose.msra.mxu0 0.0
        %1014 = vmatprep.subr.mxu0 0.0
        %1015 = vmatpush1.xpose.msra.mxu0 0.0
        %1016 = vmatprep.subr.mxu0 0.0
        %1017 = vmatpush1.xpose.msra.mxu0 0.0
        %1018 = vmatprep.subr.mxu0 0.0
        %1019 = vmatpush1.xpose.msra.mxu0 0.0
        %1020 = vmatprep.subr.mxu0 0.0
        %1021 = vmatpush1.xpose.msra.mxu0 0.0
        %1022 = vmatprep.subr.mxu0 0.0
        %1023 = vmatpush1.xpose.msra.mxu0 0.0
        %1024 = vmatprep.subr.mxu0 0.0
        %1025 = vmatpush1.xpose.msra.mxu0 0.0
        %1026 = vmatprep.subr.mxu0 0.0
        %1027 = vmatpush1.xpose.msra.mxu0 0.0
        %1028 = vmatprep.subr.mxu0 0.0
        %1029 = vmatpush1.xpose.msra.mxu0 0.0
        %1030 = vmatprep.subr.mxu0 0.0
        %1031 = vmatpush1.xpose.msra.mxu0 0.0
        %1032 = vmatprep.subr.mxu0 0.0
        %1033 = vmatpush1.xpose.msra.mxu0 0.0
        %1034 = vmatprep.subr.mxu0 0.0
        %1035 = vmatpush1.xpose.msra.mxu0 0.0
        %1036 = vmatprep.subr.mxu0 0.0
        %1037 = vmatpush1.xpose.msra.mxu0 0.0
        %1038 = vmatprep.subr.mxu0 0.0
        %1039 = vmatpush1.xpose.msra.mxu0 0.0
        %1040 = vmatprep.subr.mxu0 0.0
        %1041 = vmatpush1.xpose.msra.mxu0 0.0
        %1042 = vmatprep.subr.mxu0 0.0
        %1043 = vmatpush1.xpose.msra.mxu0 0.0
        %1044 = vmatprep.subr.mxu0 0.0
        %1045 = vmatpush1.xpose.msra.mxu0 0.0
        %1046 = vmatprep.subr.mxu0 0.0
        %1047 = vmatpush1.xpose.msra.mxu0 0.0
        %1048 = vmatprep.subr.mxu0 0.0
        %1049 = vmatpush1.xpose.msra.mxu0 0.0
        %1050 = vmatprep.subr.mxu0 0.0
        %1051 = vmatpush1.xpose.msra.mxu0 0.0
        %1052 = vmatprep.subr.mxu0 0.0
        %1053 = vmatpush1.xpose.msra.mxu0 0.0
        %1054 = vmatprep.subr.mxu0 0.0
        %1055 = vmatpush1.xpose.msra.mxu0 0.0
        %1056 = vmatprep.subr.mxu0 0.0
        %1057 = vmatpush1.xpose.msra.mxu0 0.0
        %1058 = vmatprep.subr.mxu0 0.0
        %1059 = vmatpush1.xpose.msra.mxu0 0.0
        %1060 = vmatprep.subr.mxu0 0.0
        %1061 = vmatpush1.xpose.msra.mxu0 0.0
        %1062 = vmatprep.mubr.f32.mxu0 0.0
        %1063 = vmatmul.mubr.f32.gmra.mrb[0].mxu0 %v993
        %v1064 = vpop.f32.mrb[0].mxu0
        %v1065 = vadd.f32 %v346, %v1064
        %v1066 = vpop.f32.mrb[0].mxu0
        %1067 = vdwg.mxu0
        %v1068 = vsel %vm590, %v1065, -inf
        %1069 = vmax.xlane.f32.xlu0 %v1068
        %v1070 = vpop.xlane.xlu0 %1069
        %v1071 = vsub.f32 %v1065, %v1070
        %v1072 = vmul.f32 %v1071, 1.442695
        %v1073 = vpow.pop %v1072
        %v1074 = vsel %vm590, %v1073, 0.0
        %1075 = vadd.xlane.f32.xlu0 %v1074
        %v1076 = vpop.xlane.xlu0 %1075
        %v1077 = vrcp.pop %v1076
        %v1078 = vmul.f32 %v1073, %v1077
        %v1080 = vsel %vm590, %v1078, 0
        %1082 = vmatprep.subr.mxu0 0.0
        %1083 = vmatpush1.msra.mxu0 %v989
        %1084 = vmatprep.subr.mxu0 0.0
        %1085 = vmatpush1.msra.mxu0 0.0
        %1086 = vmatprep.subr.mxu0 0.0
        %1087 = vmatpush1.msra.mxu0 0.0
        %1088 = vmatprep.subr.mxu0 0.0
        %1089 = vmatpush1.msra.mxu0 0.0
        %1090 = vmatprep.subr.mxu0 0.0
        %1091 = vmatpush1.msra.mxu0 0.0
        %1092 = vmatprep.subr.mxu0 0.0
        %1093 = vmatpush1.msra.mxu0 0.0
        %1094 = vmatprep.subr.mxu0 0.0
        %1095 = vmatpush1.msra.mxu0 0.0
        %1096 = vmatprep.subr.mxu0 0.0
        %1097 = vmatpush1.msra.mxu0 0.0
        %1098 = vmatprep.subr.mxu0 0.0
        %1099 = vmatpush1.msra.mxu0 0.0
        %1100 = vmatprep.subr.mxu0 0.0
        %1101 = vmatpush1.msra.mxu0 0.0
        %1102 = vmatprep.subr.mxu0 0.0
        %1103 = vmatpush1.msra.mxu0 0.0
        %1104 = vmatprep.subr.mxu0 0.0
        %1105 = vmatpush1.msra.mxu0 0.0
        %1106 = vmatprep.subr.mxu0 0.0
        %1107 = vmatpush1.msra.mxu0 0.0
        %1108 = vmatprep.subr.mxu0 0.0
        %1109 = vmatpush1.msra.mxu0 0.0
        %1110 = vmatprep.subr.mxu0 0.0
        %1111 = vmatpush1.msra.mxu0 0.0
        %1112 = vmatprep.subr.mxu0 0.0
        %1113 = vmatpush1.msra.mxu0 0.0
        %1114 = vmatprep.subr.mxu0 0.0
        %1115 = vmatpush1.msra.mxu0 0.0
        %1116 = vmatprep.subr.mxu0 0.0
        %1117 = vmatpush1.msra.mxu0 0.0
        %1118 = vmatprep.subr.mxu0 0.0
        %1119 = vmatpush1.msra.mxu0 0.0
        %1120 = vmatprep.subr.mxu0 0.0
        %1121 = vmatpush1.msra.mxu0 0.0
        %1122 = vmatprep.subr.mxu0 0.0
        %1123 = vmatpush1.msra.mxu0 0.0
        %1124 = vmatprep.subr.mxu0 0.0
        %1125 = vmatpush1.msra.mxu0 0.0
        %1126 = vmatprep.subr.mxu0 0.0
        %1127 = vmatpush1.msra.mxu0 0.0
        %1128 = vmatprep.subr.mxu0 0.0
        %1129 = vmatpush1.msra.mxu0 0.0
        %1130 = vmatprep.subr.mxu0 0.0
        %1131 = vmatpush1.msra.mxu0 0.0
        %1132 = vmatprep.subr.mxu0 0.0
        %1133 = vmatpush1.msra.mxu0 0.0
        %1134 = vmatprep.subr.mxu0 0.0
        %1135 = vmatpush1.msra.mxu0 0.0
        %1136 = vmatprep.subr.mxu0 0.0
        %1137 = vmatpush1.msra.mxu0 0.0
        %1138 = vmatprep.subr.mxu0 0.0
        %1139 = vmatpush1.msra.mxu0 0.0
        %1140 = vmatprep.subr.mxu0 0.0
        %1141 = vmatpush1.msra.mxu0 0.0
        %1142 = vmatprep.subr.mxu0 0.0
        %1143 = vmatpush1.msra.mxu0 0.0
        %1144 = vmatprep.subr.mxu0 0.0
        %1145 = vmatpush1.msra.mxu0 0.0
        %1146 = vmatprep.mubr.f32.mxu0 0.0
        %1147 = vmatmul.mubr.f32.gmra.mrb[0].mxu0 %v1080
        %v1148 = vpop.f32.mrb[0].mxu0
        %v1149 = vadd.f32 0.0, %v1148
        %v1150 = vpop.f32.mrb[0].mxu0
        %1151 = vdwg.mxu0
        %s1152 = scalar_lea.vmem %s4, 8
        %v1153 = vld [vmem:[%s1152] sm:$0xff]
        %v1155 = vsel %vm590, %v1149, 0
        %1157 = vmatprep.subr.mxu0 0.0
        %1158 = vmatpush1.msra.mxu0 %v1153
        %1159 = vmatprep.subr.mxu0 0.0
        %1160 = vmatpush1.msra.mxu0 0.0
        %1161 = vmatprep.subr.mxu0 0.0
        %1162 = vmatpush1.msra.mxu0 0.0
        %1163 = vmatprep.subr.mxu0 0.0
        %1164 = vmatpush1.msra.mxu0 0.0
        %1165 = vmatprep.subr.mxu0 0.0
        %1166 = vmatpush1.msra.mxu0 0.0
        %1167 = vmatprep.subr.mxu0 0.0
        %1168 = vmatpush1.msra.mxu0 0.0
        %1169 = vmatprep.subr.mxu0 0.0
        %1170 = vmatpush1.msra.mxu0 0.0
        %1171 = vmatprep.subr.mxu0 0.0
        %1172 = vmatpush1.msra.mxu0 0.0
        %1173 = vmatprep.subr.mxu0 0.0
        %1174 = vmatpush1.msra.mxu0 0.0
        %1175 = vmatprep.subr.mxu0 0.0
        %1176 = vmatpush1.msra.mxu0 0.0
        %1177 = vmatprep.subr.mxu0 0.0
        %1178 = vmatpush1.msra.mxu0 0.0
        %1179 = vmatprep.subr.mxu0 0.0
        %1180 = vmatpush1.msra.mxu0 0.0
        %1181 = vmatprep.subr.mxu0 0.0
        %1182 = vmatpush1.msra.mxu0 0.0
        %1183 = vmatprep.subr.mxu0 0.0
        %1184 = vmatpush1.msra.mxu0 0.0
        %1185 = vmatprep.subr.mxu0 0.0
        %1186 = vmatpush1.msra.mxu0 0.0
        %1187 = vmatprep.subr.mxu0 0.0
        %1188 = vmatpush1.msra.mxu0 0.0
        %1189 = vmatprep.subr.mxu0 0.0
        %1190 = vmatpush1.msra.mxu0 0.0
        %1191 = vmatprep.subr.mxu0 0.0
        %1192 = vmatpush1.msra.mxu0 0.0
        %1193 = vmatprep.subr.mxu0 0.0
        %1194 = vmatpush1.msra.mxu0 0.0
        %1195 = vmatprep.subr.mxu0 0.0
        %1196 = vmatpush1.msra.mxu0 0.0
        %1197 = vmatprep.subr.mxu0 0.0
        %1198 = vmatpush1.msra.mxu0 0.0
        %1199 = vmatprep.subr.mxu0 0.0
        %1200 = vmatpush1.msra.mxu0 0.0
        %1201 = vmatprep.subr.mxu0 0.0
        %1202 = vmatpush1.msra.mxu0 0.0
        %1203 = vmatprep.subr.mxu0 0.0
        %1204 = vmatpush1.msra.mxu0 0.0
        %1205 = vmatprep.subr.mxu0 0.0
        %1206 = vmatpush1.msra.mxu0 0.0
        %1207 = vmatprep.subr.mxu0 0.0
        %1208 = vmatpush1.msra.mxu0 0.0
        %1209 = vmatprep.subr.mxu0 0.0
        %1210 = vmatpush1.msra.mxu0 0.0
        %1211 = vmatprep.subr.mxu0 0.0
        %1212 = vmatpush1.msra.mxu0 0.0
        %1213 = vmatprep.subr.mxu0 0.0
        %1214 = vmatpush1.msra.mxu0 0.0
        %1215 = vmatprep.subr.mxu0 0.0
        %1216 = vmatpush1.msra.mxu0 0.0
        %1217 = vmatprep.subr.mxu0 0.0
        %1218 = vmatpush1.msra.mxu0 0.0
        %1219 = vmatprep.subr.mxu0 0.0
        %1220 = vmatpush1.msra.mxu0 0.0
        %1221 = vmatprep.mubr.f32.mxu0 0.0
        %1222 = vmatmul.mubr.f32.gmra.mrb[0].mxu0 %v1155
        %v1223 = vpop.f32.mrb[0].mxu0
        %v1224 = vadd.f32 0.0, %v1223
        %v1225 = vpop.f32.mrb[0].mxu0
        %1226 = vdwg.mxu0
        %v1228 = vsel %vm590, %v748, 0
        %1230 = vmatprep.subr.mxu0 0.0
        %1231 = vmatpush1.msra.mxu0 %v751
        %1232 = vmatprep.subr.mxu0 0.0
        %1233 = vmatpush1.msra.mxu0 0.0
        %1234 = vmatprep.subr.mxu0 0.0
        %1235 = vmatpush1.msra.mxu0 0.0
        %1236 = vmatprep.subr.mxu0 0.0
        %1237 = vmatpush1.msra.mxu0 0.0
        %1238 = vmatprep.subr.mxu0 0.0
        %1239 = vmatpush1.msra.mxu0 0.0
        %1240 = vmatprep.subr.mxu0 0.0
        %1241 = vmatpush1.msra.mxu0 0.0
        %1242 = vmatprep.subr.mxu0 0.0
        %1243 = vmatpush1.msra.mxu0 0.0
        %1244 = vmatprep.subr.mxu0 0.0
        %1245 = vmatpush1.msra.mxu0 0.0
        %1246 = vmatprep.subr.mxu0 0.0
        %1247 = vmatpush1.msra.mxu0 0.0
        %1248 = vmatprep.subr.mxu0 0.0
        %1249 = vmatpush1.msra.mxu0 0.0
        %1250 = vmatprep.subr.mxu0 0.0
        %1251 = vmatpush1.msra.mxu0 0.0
        %1252 = vmatprep.subr.mxu0 0.0
        %1253 = vmatpush1.msra.mxu0 0.0
        %1254 = vmatprep.subr.mxu0 0.0
        %1255 = vmatpush1.msra.mxu0 0.0
        %1256 = vmatprep.subr.mxu0 0.0
        %1257 = vmatpush1.msra.mxu0 0.0
        %1258 = vmatprep.subr.mxu0 0.0
        %1259 = vmatpush1.msra.mxu0 0.0
        %1260 = vmatprep.subr.mxu0 0.0
        %1261 = vmatpush1.msra.mxu0 0.0
        %1262 = vmatprep.subr.mxu0 0.0
        %1263 = vmatpush1.msra.mxu0 0.0
        %1264 = vmatprep.subr.mxu0 0.0
        %1265 = vmatpush1.msra.mxu0 0.0
        %1266 = vmatprep.subr.mxu0 0.0
        %1267 = vmatpush1.msra.mxu0 0.0
        %1268 = vmatprep.subr.mxu0 0.0
        %1269 = vmatpush1.msra.mxu0 0.0
        %1270 = vmatprep.subr.mxu0 0.0
        %1271 = vmatpush1.msra.mxu0 0.0
        %1272 = vmatprep.subr.mxu0 0.0
        %1273 = vmatpush1.msra.mxu0 0.0
        %1274 = vmatprep.subr.mxu0 0.0
        %1275 = vmatpush1.msra.mxu0 0.0
        %1276 = vmatprep.subr.mxu0 0.0
        %1277 = vmatpush1.msra.mxu0 0.0
        %1278 = vmatprep.subr.mxu0 0.0
        %1279 = vmatpush1.msra.mxu0 0.0
        %1280 = vmatprep.subr.mxu0 0.0
        %1281 = vmatpush1.msra.mxu0 0.0
        %1282 = vmatprep.subr.mxu0 0.0
        %1283 = vmatpush1.msra.mxu0 0.0
        %1284 = vmatprep.subr.mxu0 0.0
        %1285 = vmatpush1.msra.mxu0 0.0
        %1286 = vmatprep.subr.mxu0 0.0
        %1287 = vmatpush1.msra.mxu0 0.0
        %1288 = vmatprep.subr.mxu0 0.0
        %1289 = vmatpush1.msra.mxu0 0.0
        %1290 = vmatprep.subr.mxu0 0.0
        %1291 = vmatpush1.msra.mxu0 0.0
        %1292 = vmatprep.subr.mxu0 0.0
        %1293 = vmatpush1.msra.mxu0 0.0
        %1294 = vmatprep.mubr.f32.mxu0 0.0
        %1295 = vmatmul.mubr.f32.gmra.mrb[0].mxu0 %v1228
        %v1296 = vpop.f32.mrb[0].mxu0
        %v1297 = vadd.f32 %v1224, %v1296
        %v1298 = vpop.f32.mrb[0].mxu0
        %1299 = vdwg.mxu0
        %s1300 = scalar_lea.vmem %s2, 16
        %v1301 = vld [vmem:[%s1300] sm:$0xff]
        %v1302 = vld [vmem:[%s3 + $0x2] sm:$0x1]
        %v1303 = vlaneseq
        %v1304 = vshrl.u32 %v1303, 7
        %v1305 = vsub.s32 0, %v1304
        %v1306 = vrot.slane %v1302, %v1305
        %v1308 = vsel %vm353, %v1301, 0
        %1310 = vmatprep.subr.mxu0 0.0
        %1311 = vmatpush1.xpose.msra.mxu0 %v1308
        %1312 = vmatprep.subr.mxu0 0.0
        %1313 = vmatpush1.xpose.msra.mxu0 0.0
        %1314 = vmatprep.subr.mxu0 0.0
        %1315 = vmatpush1.xpose.msra.mxu0 0.0
        %1316 = vmatprep.subr.mxu0 0.0
        %1317 = vmatpush1.xpose.msra.mxu0 0.0
        %1318 = vmatprep.subr.mxu0 0.0
        %1319 = vmatpush1.xpose.msra.mxu0 0.0
        %1320 = vmatprep.subr.mxu0 0.0
        %1321 = vmatpush1.xpose.msra.mxu0 0.0
        %1322 = vmatprep.subr.mxu0 0.0
        %1323 = vmatpush1.xpose.msra.mxu0 0.0
        %1324 = vmatprep.subr.mxu0 0.0
        %1325 = vmatpush1.xpose.msra.mxu0 0.0
        %1326 = vmatprep.subr.mxu0 0.0
        %1327 = vmatpush1.xpose.msra.mxu0 0.0
        %1328 = vmatprep.subr.mxu0 0.0
        %1329 = vmatpush1.xpose.msra.mxu0 0.0
        %1330 = vmatprep.subr.mxu0 0.0
        %1331 = vmatpush1.xpose.msra.mxu0 0.0
        %1332 = vmatprep.subr.mxu0 0.0
        %1333 = vmatpush1.xpose.msra.mxu0 0.0
        %1334 = vmatprep.subr.mxu0 0.0
        %1335 = vmatpush1.xpose.msra.mxu0 0.0
        %1336 = vmatprep.subr.mxu0 0.0
        %1337 = vmatpush1.xpose.msra.mxu0 0.0
        %1338 = vmatprep.subr.mxu0 0.0
        %1339 = vmatpush1.xpose.msra.mxu0 0.0
        %1340 = vmatprep.subr.mxu0 0.0
        %1341 = vmatpush1.xpose.msra.mxu0 0.0
        %1342 = vmatprep.subr.mxu0 0.0
        %1343 = vmatpush1.xpose.msra.mxu0 0.0
        %1344 = vmatprep.subr.mxu0 0.0
        %1345 = vmatpush1.xpose.msra.mxu0 0.0
        %1346 = vmatprep.subr.mxu0 0.0
        %1347 = vmatpush1.xpose.msra.mxu0 0.0
        %1348 = vmatprep.subr.mxu0 0.0
        %1349 = vmatpush1.xpose.msra.mxu0 0.0
        %1350 = vmatprep.subr.mxu0 0.0
        %1351 = vmatpush1.xpose.msra.mxu0 0.0
        %1352 = vmatprep.subr.mxu0 0.0
        %1353 = vmatpush1.xpose.msra.mxu0 0.0
        %1354 = vmatprep.subr.mxu0 0.0
        %1355 = vmatpush1.xpose.msra.mxu0 0.0
        %1356 = vmatprep.subr.mxu0 0.0
        %1357 = vmatpush1.xpose.msra.mxu0 0.0
        %1358 = vmatprep.subr.mxu0 0.0
        %1359 = vmatpush1.xpose.msra.mxu0 0.0
        %1360 = vmatprep.subr.mxu0 0.0
        %1361 = vmatpush1.xpose.msra.mxu0 0.0
        %1362 = vmatprep.subr.mxu0 0.0
        %1363 = vmatpush1.xpose.msra.mxu0 0.0
        %1364 = vmatprep.subr.mxu0 0.0
        %1365 = vmatpush1.xpose.msra.mxu0 0.0
        %1366 = vmatprep.subr.mxu0 0.0
        %1367 = vmatpush1.xpose.msra.mxu0 0.0
        %1368 = vmatprep.subr.mxu0 0.0
        %1369 = vmatpush1.xpose.msra.mxu0 0.0
        %1370 = vmatprep.subr.mxu0 0.0
        %1371 = vmatpush1.xpose.msra.mxu0 0.0
        %1372 = vmatprep.subr.mxu0 0.0
        %1373 = vmatpush1.xpose.msra.mxu0 0.0
        %1374 = vmatprep.mubr.f32.mxu0 0.0
        %1375 = vmatmul.mubr.f32.gmra.mrb[0].mxu0 %v355
        %v1376 = vpop.f32.mrb[0].mxu0
        %v1377 = vadd.f32 %v1306, %v1376
        %v1378 = vpop.f32.mrb[0].mxu0
        %1379 = vdwg.mxu0
        %s1380 = scalar_lea.vmem %s2, 48
        %v1381 = vld [vmem:[%s1380] sm:$0xff]
        %v1382 = vld [vmem:[%s3 + $0x6] sm:$0x1]
        %v1383 = vlaneseq
        %v1384 = vshrl.u32 %v1383, 7
        %v1385 = vsub.s32 0, %v1384
        %v1386 = vrot.slane %v1382, %v1385
        %v1388 = vsel %vm353, %v1381, 0
        %1390 = vmatprep.subr.mxu0 0.0
        %1391 = vmatpush1.xpose.msra.mxu0 %v1388
        %1392 = vmatprep.subr.mxu0 0.0
        %1393 = vmatpush1.xpose.msra.mxu0 0.0
        %1394 = vmatprep.subr.mxu0 0.0
        %1395 = vmatpush1.xpose.msra.mxu0 0.0
        %1396 = vmatprep.subr.mxu0 0.0
        %1397 = vmatpush1.xpose.msra.mxu0 0.0
        %1398 = vmatprep.subr.mxu0 0.0
        %1399 = vmatpush1.xpose.msra.mxu0 0.0
        %1400 = vmatprep.subr.mxu0 0.0
        %1401 = vmatpush1.xpose.msra.mxu0 0.0
        %1402 = vmatprep.subr.mxu0 0.0
        %1403 = vmatpush1.xpose.msra.mxu0 0.0
        %1404 = vmatprep.subr.mxu0 0.0
        %1405 = vmatpush1.xpose.msra.mxu0 0.0
        %1406 = vmatprep.subr.mxu0 0.0
        %1407 = vmatpush1.xpose.msra.mxu0 0.0
        %1408 = vmatprep.subr.mxu0 0.0
        %1409 = vmatpush1.xpose.msra.mxu0 0.0
        %1410 = vmatprep.subr.mxu0 0.0
        %1411 = vmatpush1.xpose.msra.mxu0 0.0
        %1412 = vmatprep.subr.mxu0 0.0
        %1413 = vmatpush1.xpose.msra.mxu0 0.0
        %1414 = vmatprep.subr.mxu0 0.0
        %1415 = vmatpush1.xpose.msra.mxu0 0.0
        %1416 = vmatprep.subr.mxu0 0.0
        %1417 = vmatpush1.xpose.msra.mxu0 0.0
        %1418 = vmatprep.subr.mxu0 0.0
        %1419 = vmatpush1.xpose.msra.mxu0 0.0
        %1420 = vmatprep.subr.mxu0 0.0
        %1421 = vmatpush1.xpose.msra.mxu0 0.0
        %1422 = vmatprep.subr.mxu0 0.0
        %1423 = vmatpush1.xpose.msra.mxu0 0.0
        %1424 = vmatprep.subr.mxu0 0.0
        %1425 = vmatpush1.xpose.msra.mxu0 0.0
        %1426 = vmatprep.subr.mxu0 0.0
        %1427 = vmatpush1.xpose.msra.mxu0 0.0
        %1428 = vmatprep.subr.mxu0 0.0
        %1429 = vmatpush1.xpose.msra.mxu0 0.0
        %1430 = vmatprep.subr.mxu0 0.0
        %1431 = vmatpush1.xpose.msra.mxu0 0.0
        %1432 = vmatprep.subr.mxu0 0.0
        %1433 = vmatpush1.xpose.msra.mxu0 0.0
        %1434 = vmatprep.subr.mxu0 0.0
        %1435 = vmatpush1.xpose.msra.mxu0 0.0
        %1436 = vmatprep.subr.mxu0 0.0
        %1437 = vmatpush1.xpose.msra.mxu0 0.0
        %1438 = vmatprep.subr.mxu0 0.0
        %1439 = vmatpush1.xpose.msra.mxu0 0.0
        %1440 = vmatprep.subr.mxu0 0.0
        %1441 = vmatpush1.xpose.msra.mxu0 0.0
        %1442 = vmatprep.subr.mxu0 0.0
        %1443 = vmatpush1.xpose.msra.mxu0 0.0
        %1444 = vmatprep.subr.mxu0 0.0
        %1445 = vmatpush1.xpose.msra.mxu0 0.0
        %1446 = vmatprep.subr.mxu0 0.0
        %1447 = vmatpush1.xpose.msra.mxu0 0.0
        %1448 = vmatprep.subr.mxu0 0.0
        %1449 = vmatpush1.xpose.msra.mxu0 0.0
        %1450 = vmatprep.subr.mxu0 0.0
        %1451 = vmatpush1.xpose.msra.mxu0 0.0
        %1452 = vmatprep.subr.mxu0 0.0
        %1453 = vmatpush1.xpose.msra.mxu0 0.0
        %1454 = vmatprep.mubr.f32.mxu0 0.0
        %1455 = vmatmul.mubr.f32.gmra.mrb[0].mxu0 %v355
        %v1456 = vpop.f32.mrb[0].mxu0
        %v1457 = vadd.f32 %v1386, %v1456
        %v1458 = vpop.f32.mrb[0].mxu0
        %1459 = vdwg.mxu0
        %s1460 = scalar_lea.vmem %s2, 80
        %v1461 = vld [vmem:[%s1460] sm:$0xff]
        %v1462 = vld [vmem:[%s3 + $0xa] sm:$0x1]
        %v1463 = vlaneseq
        %v1464 = vshrl.u32 %v1463, 7
        %v1465 = vsub.s32 0, %v1464
        %v1466 = vrot.slane %v1462, %v1465
        %v1468 = vsel %vm353, %v1461, 0
        %1470 = vmatprep.subr.mxu0 0.0
        %1471 = vmatpush1.xpose.msra.mxu0 %v1468
        %1472 = vmatprep.subr.mxu0 0.0
        %1473 = vmatpush1.xpose.msra.mxu0 0.0
        %1474 = vmatprep.subr.mxu0 0.0
        %1475 = vmatpush1.xpose.msra.mxu0 0.0
        %1476 = vmatprep.subr.mxu0 0.0
        %1477 = vmatpush1.xpose.msra.mxu0 0.0
        %1478 = vmatprep.subr.mxu0 0.0
        %1479 = vmatpush1.xpose.msra.mxu0 0.0
        %1480 = vmatprep.subr.mxu0 0.0
        %1481 = vmatpush1.xpose.msra.mxu0 0.0
        %1482 = vmatprep.subr.mxu0 0.0
        %1483 = vmatpush1.xpose.msra.mxu0 0.0
        %1484 = vmatprep.subr.mxu0 0.0
        %1485 = vmatpush1.xpose.msra.mxu0 0.0
        %1486 = vmatprep.subr.mxu0 0.0
        %1487 = vmatpush1.xpose.msra.mxu0 0.0
        %1488 = vmatprep.subr.mxu0 0.0
        %1489 = vmatpush1.xpose.msra.mxu0 0.0
        %1490 = vmatprep.subr.mxu0 0.0
        %1491 = vmatpush1.xpose.msra.mxu0 0.0
        %1492 = vmatprep.subr.mxu0 0.0
        %1493 = vmatpush1.xpose.msra.mxu0 0.0
        %1494 = vmatprep.subr.mxu0 0.0
        %1495 = vmatpush1.xpose.msra.mxu0 0.0
        %1496 = vmatprep.subr.mxu0 0.0
        %1497 = vmatpush1.xpose.msra.mxu0 0.0
        %1498 = vmatprep.subr.mxu0 0.0
        %1499 = vmatpush1.xpose.msra.mxu0 0.0
        %1500 = vmatprep.subr.mxu0 0.0
        %1501 = vmatpush1.xpose.msra.mxu0 0.0
        %1502 = vmatprep.subr.mxu0 0.0
        %1503 = vmatpush1.xpose.msra.mxu0 0.0
        %1504 = vmatprep.subr.mxu0 0.0
        %1505 = vmatpush1.xpose.msra.mxu0 0.0
        %1506 = vmatprep.subr.mxu0 0.0
        %1507 = vmatpush1.xpose.msra.mxu0 0.0
        %1508 = vmatprep.subr.mxu0 0.0
        %1509 = vmatpush1.xpose.msra.mxu0 0.0
        %1510 = vmatprep.subr.mxu0 0.0
        %1511 = vmatpush1.xpose.msra.mxu0 0.0
        %1512 = vmatprep.subr.mxu0 0.0
        %1513 = vmatpush1.xpose.msra.mxu0 0.0
        %1514 = vmatprep.subr.mxu0 0.0
        %1515 = vmatpush1.xpose.msra.mxu0 0.0
        %1516 = vmatprep.subr.mxu0 0.0
        %1517 = vmatpush1.xpose.msra.mxu0 0.0
        %1518 = vmatprep.subr.mxu0 0.0
        %1519 = vmatpush1.xpose.msra.mxu0 0.0
        %1520 = vmatprep.subr.mxu0 0.0
        %1521 = vmatpush1.xpose.msra.mxu0 0.0
        %1522 = vmatprep.subr.mxu0 0.0
        %1523 = vmatpush1.xpose.msra.mxu0 0.0
        %1524 = vmatprep.subr.mxu0 0.0
        %1525 = vmatpush1.xpose.msra.mxu0 0.0
        %1526 = vmatprep.subr.mxu0 0.0
        %1527 = vmatpush1.xpose.msra.mxu0 0.0
        %1528 = vmatprep.subr.mxu0 0.0
        %1529 = vmatpush1.xpose.msra.mxu0 0.0
        %1530 = vmatprep.subr.mxu0 0.0
        %1531 = vmatpush1.xpose.msra.mxu0 0.0
        %1532 = vmatprep.subr.mxu0 0.0
        %1533 = vmatpush1.xpose.msra.mxu0 0.0
        %1534 = vmatprep.mubr.f32.mxu0 0.0
        %1535 = vmatmul.mubr.f32.gmra.mrb[0].mxu0 %v355
        %v1536 = vpop.f32.mrb[0].mxu0
        %v1537 = vadd.f32 %v1466, %v1536
        %v1538 = vpop.f32.mrb[0].mxu0
        %1539 = vdwg.mxu0
        %v1541 = vsel %vm590, %v1377, 0
        %v1544 = vsel %vm590, %v1457, 0
        %1546 = vmatprep.subr.mxu0 0.0
        %1547 = vmatpush1.xpose.msra.mxu0 %v1544
        %1548 = vmatprep.subr.mxu0 0.0
        %1549 = vmatpush1.xpose.msra.mxu0 0.0
        %1550 = vmatprep.subr.mxu0 0.0
        %1551 = vmatpush1.xpose.msra.mxu0 0.0
        %1552 = vmatprep.subr.mxu0 0.0
        %1553 = vmatpush1.xpose.msra.mxu0 0.0
        %1554 = vmatprep.subr.mxu0 0.0
        %1555 = vmatpush1.xpose.msra.mxu0 0.0
        %1556 = vmatprep.subr.mxu0 0.0
        %1557 = vmatpush1.xpose.msra.mxu0 0.0
        %1558 = vmatprep.subr.mxu0 0.0
        %1559 = vmatpush1.xpose.msra.mxu0 0.0
        %1560 = vmatprep.subr.mxu0 0.0
        %1561 = vmatpush1.xpose.msra.mxu0 0.0
        %1562 = vmatprep.subr.mxu0 0.0
        %1563 = vmatpush1.xpose.msra.mxu0 0.0
        %1564 = vmatprep.subr.mxu0 0.0
        %1565 = vmatpush1.xpose.msra.mxu0 0.0
        %1566 = vmatprep.subr.mxu0 0.0
        %1567 = vmatpush1.xpose.msra.mxu0 0.0
        %1568 = vmatprep.subr.mxu0 0.0
        %1569 = vmatpush1.xpose.msra.mxu0 0.0
        %1570 = vmatprep.subr.mxu0 0.0
        %1571 = vmatpush1.xpose.msra.mxu0 0.0
        %1572 = vmatprep.subr.mxu0 0.0
        %1573 = vmatpush1.xpose.msra.mxu0 0.0
        %1574 = vmatprep.subr.mxu0 0.0
        %1575 = vmatpush1.xpose.msra.mxu0 0.0
        %1576 = vmatprep.subr.mxu0 0.0
        %1577 = vmatpush1.xpose.msra.mxu0 0.0
        %1578 = vmatprep.subr.mxu0 0.0
        %1579 = vmatpush1.xpose.msra.mxu0 0.0
        %1580 = vmatprep.subr.mxu0 0.0
        %1581 = vmatpush1.xpose.msra.mxu0 0.0
        %1582 = vmatprep.subr.mxu0 0.0
        %1583 = vmatpush1.xpose.msra.mxu0 0.0
        %1584 = vmatprep.subr.mxu0 0.0
        %1585 = vmatpush1.xpose.msra.mxu0 0.0
        %1586 = vmatprep.subr.mxu0 0.0
        %1587 = vmatpush1.xpose.msra.mxu0 0.0
        %1588 = vmatprep.subr.mxu0 0.0
        %1589 = vmatpush1.xpose.msra.mxu0 0.0
        %1590 = vmatprep.subr.mxu0 0.0
        %1591 = vmatpush1.xpose.msra.mxu0 0.0
        %1592 = vmatprep.subr.mxu0 0.0
        %1593 = vmatpush1.xpose.msra.mxu0 0.0
        %1594 = vmatprep.subr.mxu0 0.0
        %1595 = vmatpush1.xpose.msra.mxu0 0.0
        %1596 = vmatprep.subr.mxu0 0.0
        %1597 = vmatpush1.xpose.msra.mxu0 0.0
        %1598 = vmatprep.subr.mxu0 0.0
        %1599 = vmatpush1.xpose.msra.mxu0 0.0
        %1600 = vmatprep.subr.mxu0 0.0
        %1601 = vmatpush1.xpose.msra.mxu0 0.0
        %1602 = vmatprep.subr.mxu0 0.0
        %1603 = vmatpush1.xpose.msra.mxu0 0.0
        %1604 = vmatprep.subr.mxu0 0.0
        %1605 = vmatpush1.xpose.msra.mxu0 0.0
        %1606 = vmatprep.subr.mxu0 0.0
        %1607 = vmatpush1.xpose.msra.mxu0 0.0
        %1608 = vmatprep.subr.mxu0 0.0
        %1609 = vmatpush1.xpose.msra.mxu0 0.0
        %1610 = vmatprep.mubr.f32.mxu0 0.0
        %1611 = vmatmul.mubr.f32.gmra.mrb[0].mxu0 %v1541
        %v1612 = vpop.f32.mrb[0].mxu0
        %v1613 = vadd.f32 %v346, %v1612
        %v1614 = vpop.f32.mrb[0].mxu0
        %1615 = vdwg.mxu0
        %v1616 = vsel %vm590, %v1613, -inf
        %1617 = vmax.xlane.f32.xlu0 %v1616
        %v1618 = vpop.xlane.xlu0 %1617
        %v1619 = vsub.f32 %v1613, %v1618
        %v1620 = vmul.f32 %v1619, 1.442695
        %v1621 = vpow.pop %v1620
        %v1622 = vsel %vm590, %v1621, 0.0
        %1623 = vadd.xlane.f32.xlu0 %v1622
        %v1624 = vpop.xlane.xlu0 %1623
        %v1625 = vrcp.pop %v1624
        %v1626 = vmul.f32 %v1621, %v1625
        %v1628 = vsel %vm590, %v1626, 0
        %1630 = vmatprep.subr.mxu0 0.0
        %1631 = vmatpush1.msra.mxu0 %v1537
        %1632 = vmatprep.subr.mxu0 0.0
        %1633 = vmatpush1.msra.mxu0 0.0
        %1634 = vmatprep.subr.mxu0 0.0
        %1635 = vmatpush1.msra.mxu0 0.0
        %1636 = vmatprep.subr.mxu0 0.0
        %1637 = vmatpush1.msra.mxu0 0.0
        %1638 = vmatprep.subr.mxu0 0.0
        %1639 = vmatpush1.msra.mxu0 0.0
        %1640 = vmatprep.subr.mxu0 0.0
        %1641 = vmatpush1.msra.mxu0 0.0
        %1642 = vmatprep.subr.mxu0 0.0
        %1643 = vmatpush1.msra.mxu0 0.0
        %1644 = vmatprep.subr.mxu0 0.0
        %1645 = vmatpush1.msra.mxu0 0.0
        %1646 = vmatprep.subr.mxu0 0.0
        %1647 = vmatpush1.msra.mxu0 0.0
        %1648 = vmatprep.subr.mxu0 0.0
        %1649 = vmatpush1.msra.mxu0 0.0
        %1650 = vmatprep.subr.mxu0 0.0
        %1651 = vmatpush1.msra.mxu0 0.0
        %1652 = vmatprep.subr.mxu0 0.0
        %1653 = vmatpush1.msra.mxu0 0.0
        %1654 = vmatprep.subr.mxu0 0.0
        %1655 = vmatpush1.msra.mxu0 0.0
        %1656 = vmatprep.subr.mxu0 0.0
        %1657 = vmatpush1.msra.mxu0 0.0
        %1658 = vmatprep.subr.mxu0 0.0
        %1659 = vmatpush1.msra.mxu0 0.0
        %1660 = vmatprep.subr.mxu0 0.0
        %1661 = vmatpush1.msra.mxu0 0.0
        %1662 = vmatprep.subr.mxu0 0.0
        %1663 = vmatpush1.msra.mxu0 0.0
        %1664 = vmatprep.subr.mxu0 0.0
        %1665 = vmatpush1.msra.mxu0 0.0
        %1666 = vmatprep.subr.mxu0 0.0
        %1667 = vmatpush1.msra.mxu0 0.0
        %1668 = vmatprep.subr.mxu0 0.0
        %1669 = vmatpush1.msra.mxu0 0.0
        %1670 = vmatprep.subr.mxu0 0.0
        %1671 = vmatpush1.msra.mxu0 0.0
        %1672 = vmatprep.subr.mxu0 0.0
        %1673 = vmatpush1.msra.mxu0 0.0
        %1674 = vmatprep.subr.mxu0 0.0
        %1675 = vmatpush1.msra.mxu0 0.0
        %1676 = vmatprep.subr.mxu0 0.0
        %1677 = vmatpush1.msra.mxu0 0.0
        %1678 = vmatprep.subr.mxu0 0.0
        %1679 = vmatpush1.msra.mxu0 0.0
        %1680 = vmatprep.subr.mxu0 0.0
        %1681 = vmatpush1.msra.mxu0 0.0
        %1682 = vmatprep.subr.mxu0 0.0
        %1683 = vmatpush1.msra.mxu0 0.0
        %1684 = vmatprep.subr.mxu0 0.0
        %1685 = vmatpush1.msra.mxu0 0.0
        %1686 = vmatprep.subr.mxu0 0.0
        %1687 = vmatpush1.msra.mxu0 0.0
        %1688 = vmatprep.subr.mxu0 0.0
        %1689 = vmatpush1.msra.mxu0 0.0
        %1690 = vmatprep.subr.mxu0 0.0
        %1691 = vmatpush1.msra.mxu0 0.0
        %1692 = vmatprep.subr.mxu0 0.0
        %1693 = vmatpush1.msra.mxu0 0.0
        %1694 = vmatprep.mubr.f32.mxu0 0.0
        %1695 = vmatmul.mubr.f32.gmra.mrb[0].mxu0 %v1628
        %v1696 = vpop.f32.mrb[0].mxu0
        %v1697 = vadd.f32 0.0, %v1696
        %v1698 = vpop.f32.mrb[0].mxu0
        %1699 = vdwg.mxu0
        %s1700 = scalar_lea.vmem %s4, 16
        %v1701 = vld [vmem:[%s1700] sm:$0xff]
        %v1703 = vsel %vm590, %v1697, 0
        %1705 = vmatprep.subr.mxu0 0.0
        %1706 = vmatpush1.msra.mxu0 %v1701
        %1707 = vmatprep.subr.mxu0 0.0
        %1708 = vmatpush1.msra.mxu0 0.0
        %1709 = vmatprep.subr.mxu0 0.0
        %1710 = vmatpush1.msra.mxu0 0.0
        %1711 = vmatprep.subr.mxu0 0.0
        %1712 = vmatpush1.msra.mxu0 0.0
        %1713 = vmatprep.subr.mxu0 0.0
        %1714 = vmatpush1.msra.mxu0 0.0
        %1715 = vmatprep.subr.mxu0 0.0
        %1716 = vmatpush1.msra.mxu0 0.0
        %1717 = vmatprep.subr.mxu0 0.0
        %1718 = vmatpush1.msra.mxu0 0.0
        %1719 = vmatprep.subr.mxu0 0.0
        %1720 = vmatpush1.msra.mxu0 0.0
        %1721 = vmatprep.subr.mxu0 0.0
        %1722 = vmatpush1.msra.mxu0 0.0
        %1723 = vmatprep.subr.mxu0 0.0
        %1724 = vmatpush1.msra.mxu0 0.0
        %1725 = vmatprep.subr.mxu0 0.0
        %1726 = vmatpush1.msra.mxu0 0.0
        %1727 = vmatprep.subr.mxu0 0.0
        %1728 = vmatpush1.msra.mxu0 0.0
        %1729 = vmatprep.subr.mxu0 0.0
        %1730 = vmatpush1.msra.mxu0 0.0
        %1731 = vmatprep.subr.mxu0 0.0
        %1732 = vmatpush1.msra.mxu0 0.0
        %1733 = vmatprep.subr.mxu0 0.0
        %1734 = vmatpush1.msra.mxu0 0.0
        %1735 = vmatprep.subr.mxu0 0.0
        %1736 = vmatpush1.msra.mxu0 0.0
        %1737 = vmatprep.subr.mxu0 0.0
        %1738 = vmatpush1.msra.mxu0 0.0
        %1739 = vmatprep.subr.mxu0 0.0
        %1740 = vmatpush1.msra.mxu0 0.0
        %1741 = vmatprep.subr.mxu0 0.0
        %1742 = vmatpush1.msra.mxu0 0.0
        %1743 = vmatprep.subr.mxu0 0.0
        %1744 = vmatpush1.msra.mxu0 0.0
        %1745 = vmatprep.subr.mxu0 0.0
        %1746 = vmatpush1.msra.mxu0 0.0
        %1747 = vmatprep.subr.mxu0 0.0
        %1748 = vmatpush1.msra.mxu0 0.0
        %1749 = vmatprep.subr.mxu0 0.0
        %1750 = vmatpush1.msra.mxu0 0.0
        %1751 = vmatprep.subr.mxu0 0.0
        %1752 = vmatpush1.msra.mxu0 0.0
        %1753 = vmatprep.subr.mxu0 0.0
        %1754 = vmatpush1.msra.mxu0 0.0
        %1755 = vmatprep.subr.mxu0 0.0
        %1756 = vmatpush1.msra.mxu0 0.0
        %1757 = vmatprep.subr.mxu0 0.0
        %1758 = vmatpush1.msra.mxu0 0.0
        %1759 = vmatprep.subr.mxu0 0.0
        %1760 = vmatpush1.msra.mxu0 0.0
        %1761 = vmatprep.subr.mxu0 0.0
        %1762 = vmatpush1.msra.mxu0 0.0
        %1763 = vmatprep.subr.mxu0 0.0
        %1764 = vmatpush1.msra.mxu0 0.0
        %1765 = vmatprep.subr.mxu0 0.0
        %1766 = vmatpush1.msra.mxu0 0.0
        %1767 = vmatprep.subr.mxu0 0.0
        %1768 = vmatpush1.msra.mxu0 0.0
        %1769 = vmatprep.mubr.f32.mxu0 0.0
        %1770 = vmatmul.mubr.f32.gmra.mrb[0].mxu0 %v1703
        %v1771 = vpop.f32.mrb[0].mxu0
        %v1772 = vadd.f32 0.0, %v1771
        %v1773 = vpop.f32.mrb[0].mxu0
        %1774 = vdwg.mxu0
        %v1775 = vadd.f32 %v1297, %v1772
        %s1776 = scalar_lea.vmem %s2, 24
        %v1777 = vld [vmem:[%s1776] sm:$0xff]
        %v1778 = vld [vmem:[%s3 + $0x3] sm:$0x1]
        %v1779 = vlaneseq
        %v1780 = vshrl.u32 %v1779, 7
        %v1781 = vsub.s32 0, %v1780
        %v1782 = vrot.slane %v1778, %v1781
        %v1784 = vsel %vm353, %v1777, 0
        %1786 = vmatprep.subr.mxu0 0.0
        %1787 = vmatpush1.xpose.msra.mxu0 %v1784
        %1788 = vmatprep.subr.mxu0 0.0
        %1789 = vmatpush1.xpose.msra.mxu0 0.0
        %1790 = vmatprep.subr.mxu0 0.0
        %1791 = vmatpush1.xpose.msra.mxu0 0.0
        %1792 = vmatprep.subr.mxu0 0.0
        %1793 = vmatpush1.xpose.msra.mxu0 0.0
        %1794 = vmatprep.subr.mxu0 0.0
        %1795 = vmatpush1.xpose.msra.mxu0 0.0
        %1796 = vmatprep.subr.mxu0 0.0
        %1797 = vmatpush1.xpose.msra.mxu0 0.0
        %1798 = vmatprep.subr.mxu0 0.0
        %1799 = vmatpush1.xpose.msra.mxu0 0.0
        %1800 = vmatprep.subr.mxu0 0.0
        %1801 = vmatpush1.xpose.msra.mxu0 0.0
        %1802 = vmatprep.subr.mxu0 0.0
        %1803 = vmatpush1.xpose.msra.mxu0 0.0
        %1804 = vmatprep.subr.mxu0 0.0
        %1805 = vmatpush1.xpose.msra.mxu0 0.0
        %1806 = vmatprep.subr.mxu0 0.0
        %1807 = vmatpush1.xpose.msra.mxu0 0.0
        %1808 = vmatprep.subr.mxu0 0.0
        %1809 = vmatpush1.xpose.msra.mxu0 0.0
        %1810 = vmatprep.subr.mxu0 0.0
        %1811 = vmatpush1.xpose.msra.mxu0 0.0
        %1812 = vmatprep.subr.mxu0 0.0
        %1813 = vmatpush1.xpose.msra.mxu0 0.0
        %1814 = vmatprep.subr.mxu0 0.0
        %1815 = vmatpush1.xpose.msra.mxu0 0.0
        %1816 = vmatprep.subr.mxu0 0.0
        %1817 = vmatpush1.xpose.msra.mxu0 0.0
        %1818 = vmatprep.subr.mxu0 0.0
        %1819 = vmatpush1.xpose.msra.mxu0 0.0
        %1820 = vmatprep.subr.mxu0 0.0
        %1821 = vmatpush1.xpose.msra.mxu0 0.0
        %1822 = vmatprep.subr.mxu0 0.0
        %1823 = vmatpush1.xpose.msra.mxu0 0.0
        %1824 = vmatprep.subr.mxu0 0.0
        %1825 = vmatpush1.xpose.msra.mxu0 0.0
        %1826 = vmatprep.subr.mxu0 0.0
        %1827 = vmatpush1.xpose.msra.mxu0 0.0
        %1828 = vmatprep.subr.mxu0 0.0
        %1829 = vmatpush1.xpose.msra.mxu0 0.0
        %1830 = vmatprep.subr.mxu0 0.0
        %1831 = vmatpush1.xpose.msra.mxu0 0.0
        %1832 = vmatprep.subr.mxu0 0.0
        %1833 = vmatpush1.xpose.msra.mxu0 0.0
        %1834 = vmatprep.subr.mxu0 0.0
        %1835 = vmatpush1.xpose.msra.mxu0 0.0
        %1836 = vmatprep.subr.mxu0 0.0
        %1837 = vmatpush1.xpose.msra.mxu0 0.0
        %1838 = vmatprep.subr.mxu0 0.0
        %1839 = vmatpush1.xpose.msra.mxu0 0.0
        %1840 = vmatprep.subr.mxu0 0.0
        %1841 = vmatpush1.xpose.msra.mxu0 0.0
        %1842 = vmatprep.subr.mxu0 0.0
        %1843 = vmatpush1.xpose.msra.mxu0 0.0
        %1844 = vmatprep.subr.mxu0 0.0
        %1845 = vmatpush1.xpose.msra.mxu0 0.0
        %1846 = vmatprep.subr.mxu0 0.0
        %1847 = vmatpush1.xpose.msra.mxu0 0.0
        %1848 = vmatprep.subr.mxu0 0.0
        %1849 = vmatpush1.xpose.msra.mxu0 0.0
        %1850 = vmatprep.mubr.f32.mxu0 0.0
        %1851 = vmatmul.mubr.f32.gmra.mrb[0].mxu0 %v355
        %v1852 = vpop.f32.mrb[0].mxu0
        %v1853 = vadd.f32 %v1782, %v1852
        %v1854 = vpop.f32.mrb[0].mxu0
        %1855 = vdwg.mxu0
        %s1856 = scalar_lea.vmem %s2, 56
        %v1857 = vld [vmem:[%s1856] sm:$0xff]
        %v1858 = vld [vmem:[%s3 + $0x7] sm:$0x1]
        %v1859 = vlaneseq
        %v1860 = vshrl.u32 %v1859, 7
        %v1861 = vsub.s32 0, %v1860
        %v1862 = vrot.slane %v1858, %v1861
        %v1864 = vsel %vm353, %v1857, 0
        %1866 = vmatprep.subr.mxu0 0.0
        %1867 = vmatpush1.xpose.msra.mxu0 %v1864
        %1868 = vmatprep.subr.mxu0 0.0
        %1869 = vmatpush1.xpose.msra.mxu0 0.0
        %1870 = vmatprep.subr.mxu0 0.0
        %1871 = vmatpush1.xpose.msra.mxu0 0.0
        %1872 = vmatprep.subr.mxu0 0.0
        %1873 = vmatpush1.xpose.msra.mxu0 0.0
        %1874 = vmatprep.subr.mxu0 0.0
        %1875 = vmatpush1.xpose.msra.mxu0 0.0
        %1876 = vmatprep.subr.mxu0 0.0
        %1877 = vmatpush1.xpose.msra.mxu0 0.0
        %1878 = vmatprep.subr.mxu0 0.0
        %1879 = vmatpush1.xpose.msra.mxu0 0.0
        %1880 = vmatprep.subr.mxu0 0.0
        %1881 = vmatpush1.xpose.msra.mxu0 0.0
        %1882 = vmatprep.subr.mxu0 0.0
        %1883 = vmatpush1.xpose.msra.mxu0 0.0
        %1884 = vmatprep.subr.mxu0 0.0
        %1885 = vmatpush1.xpose.msra.mxu0 0.0
        %1886 = vmatprep.subr.mxu0 0.0
        %1887 = vmatpush1.xpose.msra.mxu0 0.0
        %1888 = vmatprep.subr.mxu0 0.0
        %1889 = vmatpush1.xpose.msra.mxu0 0.0
        %1890 = vmatprep.subr.mxu0 0.0
        %1891 = vmatpush1.xpose.msra.mxu0 0.0
        %1892 = vmatprep.subr.mxu0 0.0
        %1893 = vmatpush1.xpose.msra.mxu0 0.0
        %1894 = vmatprep.subr.mxu0 0.0
        %1895 = vmatpush1.xpose.msra.mxu0 0.0
        %1896 = vmatprep.subr.mxu0 0.0
        %1897 = vmatpush1.xpose.msra.mxu0 0.0
        %1898 = vmatprep.subr.mxu0 0.0
        %1899 = vmatpush1.xpose.msra.mxu0 0.0
        %1900 = vmatprep.subr.mxu0 0.0
        %1901 = vmatpush1.xpose.msra.mxu0 0.0
        %1902 = vmatprep.subr.mxu0 0.0
        %1903 = vmatpush1.xpose.msra.mxu0 0.0
        %1904 = vmatprep.subr.mxu0 0.0
        %1905 = vmatpush1.xpose.msra.mxu0 0.0
        %1906 = vmatprep.subr.mxu0 0.0
        %1907 = vmatpush1.xpose.msra.mxu0 0.0
        %1908 = vmatprep.subr.mxu0 0.0
        %1909 = vmatpush1.xpose.msra.mxu0 0.0
        %1910 = vmatprep.subr.mxu0 0.0
        %1911 = vmatpush1.xpose.msra.mxu0 0.0
        %1912 = vmatprep.subr.mxu0 0.0
        %1913 = vmatpush1.xpose.msra.mxu0 0.0
        %1914 = vmatprep.subr.mxu0 0.0
        %1915 = vmatpush1.xpose.msra.mxu0 0.0
        %1916 = vmatprep.subr.mxu0 0.0
        %1917 = vmatpush1.xpose.msra.mxu0 0.0
        %1918 = vmatprep.subr.mxu0 0.0
        %1919 = vmatpush1.xpose.msra.mxu0 0.0
        %1920 = vmatprep.subr.mxu0 0.0
        %1921 = vmatpush1.xpose.msra.mxu0 0.0
        %1922 = vmatprep.subr.mxu0 0.0
        %1923 = vmatpush1.xpose.msra.mxu0 0.0
        %1924 = vmatprep.subr.mxu0 0.0
        %1925 = vmatpush1.xpose.msra.mxu0 0.0
        %1926 = vmatprep.subr.mxu0 0.0
        %1927 = vmatpush1.xpose.msra.mxu0 0.0
        %1928 = vmatprep.subr.mxu0 0.0
        %1929 = vmatpush1.xpose.msra.mxu0 0.0
        %1930 = vmatprep.mubr.f32.mxu0 0.0
        %1931 = vmatmul.mubr.f32.gmra.mrb[0].mxu0 %v355
        %v1932 = vpop.f32.mrb[0].mxu0
        %v1933 = vadd.f32 %v1862, %v1932
        %v1934 = vpop.f32.mrb[0].mxu0
        %1935 = vdwg.mxu0
        %s1936 = scalar_lea.vmem %s2, 88
        %v1937 = vld [vmem:[%s1936] sm:$0xff]
        %v1938 = vld [vmem:[%s3 + $0xb] sm:$0x1]
        %v1939 = vlaneseq
        %v1940 = vshrl.u32 %v1939, 7
        %v1941 = vsub.s32 0, %v1940
        %v1942 = vrot.slane %v1938, %v1941
        %v1944 = vsel %vm353, %v1937, 0
        %1946 = vmatprep.subr.mxu0 0.0
        %1947 = vmatpush1.xpose.msra.mxu0 %v1944
        %1948 = vmatprep.subr.mxu0 0.0
        %1949 = vmatpush1.xpose.msra.mxu0 0.0
        %1950 = vmatprep.subr.mxu0 0.0
        %1951 = vmatpush1.xpose.msra.mxu0 0.0
        %1952 = vmatprep.subr.mxu0 0.0
        %1953 = vmatpush1.xpose.msra.mxu0 0.0
        %1954 = vmatprep.subr.mxu0 0.0
        %1955 = vmatpush1.xpose.msra.mxu0 0.0
        %1956 = vmatprep.subr.mxu0 0.0
        %1957 = vmatpush1.xpose.msra.mxu0 0.0
        %1958 = vmatprep.subr.mxu0 0.0
        %1959 = vmatpush1.xpose.msra.mxu0 0.0
        %1960 = vmatprep.subr.mxu0 0.0
        %1961 = vmatpush1.xpose.msra.mxu0 0.0
        %1962 = vmatprep.subr.mxu0 0.0
        %1963 = vmatpush1.xpose.msra.mxu0 0.0
        %1964 = vmatprep.subr.mxu0 0.0
        %1965 = vmatpush1.xpose.msra.mxu0 0.0
        %1966 = vmatprep.subr.mxu0 0.0
        %1967 = vmatpush1.xpose.msra.mxu0 0.0
        %1968 = vmatprep.subr.mxu0 0.0
        %1969 = vmatpush1.xpose.msra.mxu0 0.0
        %1970 = vmatprep.subr.mxu0 0.0
        %1971 = vmatpush1.xpose.msra.mxu0 0.0
        %1972 = vmatprep.subr.mxu0 0.0
        %1973 = vmatpush1.xpose.msra.mxu0 0.0
        %1974 = vmatprep.subr.mxu0 0.0
        %1975 = vmatpush1.xpose.msra.mxu0 0.0
        %1976 = vmatprep.subr.mxu0 0.0
        %1977 = vmatpush1.xpose.msra.mxu0 0.0
        %1978 = vmatprep.subr.mxu0 0.0
        %1979 = vmatpush1.xpose.msra.mxu0 0.0
        %1980 = vmatprep.subr.mxu0 0.0
        %1981 = vmatpush1.xpose.msra.mxu0 0.0
        %1982 = vmatprep.subr.mxu0 0.0
        %1983 = vmatpush1.xpose.msra.mxu0 0.0
        %1984 = vmatprep.subr.mxu0 0.0
        %1985 = vmatpush1.xpose.msra.mxu0 0.0
        %1986 = vmatprep.subr.mxu0 0.0
        %1987 = vmatpush1.xpose.msra.mxu0 0.0
        %1988 = vmatprep.subr.mxu0 0.0
        %1989 = vmatpush1.xpose.msra.mxu0 0.0
        %1990 = vmatprep.subr.mxu0 0.0
        %1991 = vmatpush1.xpose.msra.mxu0 0.0
        %1992 = vmatprep.subr.mxu0 0.0
        %1993 = vmatpush1.xpose.msra.mxu0 0.0
        %1994 = vmatprep.subr.mxu0 0.0
        %1995 = vmatpush1.xpose.msra.mxu0 0.0
        %1996 = vmatprep.subr.mxu0 0.0
        %1997 = vmatpush1.xpose.msra.mxu0 0.0
        %1998 = vmatprep.subr.mxu0 0.0
        %1999 = vmatpush1.xpose.msra.mxu0 0.0
        %2000 = vmatprep.subr.mxu0 0.0
        %2001 = vmatpush1.xpose.msra.mxu0 0.0
        %2002 = vmatprep.subr.mxu0 0.0
        %2003 = vmatpush1.xpose.msra.mxu0 0.0
        %2004 = vmatprep.subr.mxu0 0.0
        %2005 = vmatpush1.xpose.msra.mxu0 0.0
        %2006 = vmatprep.subr.mxu0 0.0
        %2007 = vmatpush1.xpose.msra.mxu0 0.0
        %2008 = vmatprep.subr.mxu0 0.0
        %2009 = vmatpush1.xpose.msra.mxu0 0.0
        %2010 = vmatprep.mubr.f32.mxu0 0.0
        %2011 = vmatmul.mubr.f32.gmra.mrb[0].mxu0 %v355
        %v2012 = vpop.f32.mrb[0].mxu0
        %v2013 = vadd.f32 %v1942, %v2012
        %v2014 = vpop.f32.mrb[0].mxu0
        %2015 = vdwg.mxu0
        %v2017 = vsel %vm590, %v1853, 0
        %v2020 = vsel %vm590, %v1933, 0
        %2022 = vmatprep.subr.mxu0 0.0
        %2023 = vmatpush1.xpose.msra.mxu0 %v2020
        %2024 = vmatprep.subr.mxu0 0.0
        %2025 = vmatpush1.xpose.msra.mxu0 0.0
        %2026 = vmatprep.subr.mxu0 0.0
        %2027 = vmatpush1.xpose.msra.mxu0 0.0
        %2028 = vmatprep.subr.mxu0 0.0
        %2029 = vmatpush1.xpose.msra.mxu0 0.0
        %2030 = vmatprep.subr.mxu0 0.0
        %2031 = vmatpush1.xpose.msra.mxu0 0.0
        %2032 = vmatprep.subr.mxu0 0.0
        %2033 = vmatpush1.xpose.msra.mxu0 0.0
        %2034 = vmatprep.subr.mxu0 0.0
        %2035 = vmatpush1.xpose.msra.mxu0 0.0
        %2036 = vmatprep.subr.mxu0 0.0
        %2037 = vmatpush1.xpose.msra.mxu0 0.0
        %2038 = vmatprep.subr.mxu0 0.0
        %2039 = vmatpush1.xpose.msra.mxu0 0.0
        %2040 = vmatprep.subr.mxu0 0.0
        %2041 = vmatpush1.xpose.msra.mxu0 0.0
        %2042 = vmatprep.subr.mxu0 0.0
        %2043 = vmatpush1.xpose.msra.mxu0 0.0
        %2044 = vmatprep.subr.mxu0 0.0
        %2045 = vmatpush1.xpose.msra.mxu0 0.0
        %2046 = vmatprep.subr.mxu0 0.0
        %2047 = vmatpush1.xpose.msra.mxu0 0.0
        %2048 = vmatprep.subr.mxu0 0.0
        %2049 = vmatpush1.xpose.msra.mxu0 0.0
        %2050 = vmatprep.subr.mxu0 0.0
        %2051 = vmatpush1.xpose.msra.mxu0 0.0
        %2052 = vmatprep.subr.mxu0 0.0
        %2053 = vmatpush1.xpose.msra.mxu0 0.0
        %2054 = vmatprep.subr.mxu0 0.0
        %2055 = vmatpush1.xpose.msra.mxu0 0.0
        %2056 = vmatprep.subr.mxu0 0.0
        %2057 = vmatpush1.xpose.msra.mxu0 0.0
        %2058 = vmatprep.subr.mxu0 0.0
        %2059 = vmatpush1.xpose.msra.mxu0 0.0
        %2060 = vmatprep.subr.mxu0 0.0
        %2061 = vmatpush1.xpose.msra.mxu0 0.0
        %2062 = vmatprep.subr.mxu0 0.0
        %2063 = vmatpush1.xpose.msra.mxu0 0.0
        %2064 = vmatprep.subr.mxu0 0.0
        %2065 = vmatpush1.xpose.msra.mxu0 0.0
        %2066 = vmatprep.subr.mxu0 0.0
        %2067 = vmatpush1.xpose.msra.mxu0 0.0
        %2068 = vmatprep.subr.mxu0 0.0
        %2069 = vmatpush1.xpose.msra.mxu0 0.0
        %2070 = vmatprep.subr.mxu0 0.0
        %2071 = vmatpush1.xpose.msra.mxu0 0.0
        %2072 = vmatprep.subr.mxu0 0.0
        %2073 = vmatpush1.xpose.msra.mxu0 0.0
        %2074 = vmatprep.subr.mxu0 0.0
        %2075 = vmatpush1.xpose.msra.mxu0 0.0
        %2076 = vmatprep.subr.mxu0 0.0
        %2077 = vmatpush1.xpose.msra.mxu0 0.0
        %2078 = vmatprep.subr.mxu0 0.0
        %2079 = vmatpush1.xpose.msra.mxu0 0.0
        %2080 = vmatprep.subr.mxu0 0.0
        %2081 = vmatpush1.xpose.msra.mxu0 0.0
        %2082 = vmatprep.subr.mxu0 0.0
        %2083 = vmatpush1.xpose.msra.mxu0 0.0
        %2084 = vmatprep.subr.mxu0 0.0
        %2085 = vmatpush1.xpose.msra.mxu0 0.0
        %2086 = vmatprep.mubr.f32.mxu0 0.0
        %2087 = vmatmul.mubr.f32.gmra.mrb[0].mxu0 %v2017
        %v2088 = vpop.f32.mrb[0].mxu0
        %v2089 = vadd.f32 %v346, %v2088
        %v2090 = vpop.f32.mrb[0].mxu0
        %2091 = vdwg.mxu0
        %v2092 = vsel %vm590, %v2089, -inf
        %2093 = vmax.xlane.f32.xlu0 %v2092
        %v2094 = vpop.xlane.xlu0 %2093
        %v2095 = vsub.f32 %v2089, %v2094
        %v2096 = vmul.f32 %v2095, 1.442695
        %v2097 = vpow.pop %v2096
        %v2098 = vsel %vm590, %v2097, 0.0
        %2099 = vadd.xlane.f32.xlu0 %v2098
        %v2100 = vpop.xlane.xlu0 %2099
        %v2101 = vrcp.pop %v2100
        %v2102 = vmul.f32 %v2097, %v2101
        %v2104 = vsel %vm590, %v2102, 0
        %2106 = vmatprep.subr.mxu0 0.0
        %2107 = vmatpush1.msra.mxu0 %v2013
        %2108 = vmatprep.subr.mxu0 0.0
        %2109 = vmatpush1.msra.mxu0 0.0
        %2110 = vmatprep.subr.mxu0 0.0
        %2111 = vmatpush1.msra.mxu0 0.0
        %2112 = vmatprep.subr.mxu0 0.0
        %2113 = vmatpush1.msra.mxu0 0.0
        %2114 = vmatprep.subr.mxu0 0.0
        %2115 = vmatpush1.msra.mxu0 0.0
        %2116 = vmatprep.subr.mxu0 0.0
        %2117 = vmatpush1.msra.mxu0 0.0
        %2118 = vmatprep.subr.mxu0 0.0
        %2119 = vmatpush1.msra.mxu0 0.0
        %2120 = vmatprep.subr.mxu0 0.0
        %2121 = vmatpush1.msra.mxu0 0.0
        %2122 = vmatprep.subr.mxu0 0.0
        %2123 = vmatpush1.msra.mxu0 0.0
        %2124 = vmatprep.subr.mxu0 0.0
        %2125 = vmatpush1.msra.mxu0 0.0
        %2126 = vmatprep.subr.mxu0 0.0
        %2127 = vmatpush1.msra.mxu0 0.0
        %2128 = vmatprep.subr.mxu0 0.0
        %2129 = vmatpush1.msra.mxu0 0.0
        %2130 = vmatprep.subr.mxu0 0.0
        %2131 = vmatpush1.msra.mxu0 0.0
        %2132 = vmatprep.subr.mxu0 0.0
        %2133 = vmatpush1.msra.mxu0 0.0
        %2134 = vmatprep.subr.mxu0 0.0
        %2135 = vmatpush1.msra.mxu0 0.0
        %2136 = vmatprep.subr.mxu0 0.0
        %2137 = vmatpush1.msra.mxu0 0.0
        %2138 = vmatprep.subr.mxu0 0.0
        %2139 = vmatpush1.msra.mxu0 0.0
        %2140 = vmatprep.subr.mxu0 0.0
        %2141 = vmatpush1.msra.mxu0 0.0
        %2142 = vmatprep.subr.mxu0 0.0
        %2143 = vmatpush1.msra.mxu0 0.0
        %2144 = vmatprep.subr.mxu0 0.0
        %2145 = vmatpush1.msra.mxu0 0.0
        %2146 = vmatprep.subr.mxu0 0.0
        %2147 = vmatpush1.msra.mxu0 0.0
        %2148 = vmatprep.subr.mxu0 0.0
        %2149 = vmatpush1.msra.mxu0 0.0
        %2150 = vmatprep.subr.mxu0 0.0
        %2151 = vmatpush1.msra.mxu0 0.0
        %2152 = vmatprep.subr.mxu0 0.0
        %2153 = vmatpush1.msra.mxu0 0.0
        %2154 = vmatprep.subr.mxu0 0.0
        %2155 = vmatpush1.msra.mxu0 0.0
        %2156 = vmatprep.subr.mxu0 0.0
        %2157 = vmatpush1.msra.mxu0 0.0
        %2158 = vmatprep.subr.mxu0 0.0
        %2159 = vmatpush1.msra.mxu0 0.0
        %2160 = vmatprep.subr.mxu0 0.0
        %2161 = vmatpush1.msra.mxu0 0.0
        %2162 = vmatprep.subr.mxu0 0.0
        %2163 = vmatpush1.msra.mxu0 0.0
        %2164 = vmatprep.subr.mxu0 0.0
        %2165 = vmatpush1.msra.mxu0 0.0
        %2166 = vmatprep.subr.mxu0 0.0
        %2167 = vmatpush1.msra.mxu0 0.0
        %2168 = vmatprep.subr.mxu0 0.0
        %2169 = vmatpush1.msra.mxu0 0.0
        %2170 = vmatprep.mubr.f32.mxu0 0.0
        %2171 = vmatmul.mubr.f32.gmra.mrb[0].mxu0 %v2104
        %v2172 = vpop.f32.mrb[0].mxu0
        %v2173 = vadd.f32 0.0, %v2172
        %v2174 = vpop.f32.mrb[0].mxu0
        %2175 = vdwg.mxu0
        %s2176 = scalar_lea.vmem %s4, 24
        %v2177 = vld [vmem:[%s2176] sm:$0xff]
        %v2179 = vsel %vm590, %v2173, 0
        %2181 = vmatprep.subr.mxu0 0.0
        %2182 = vmatpush1.msra.mxu0 %v2177
        %2183 = vmatprep.subr.mxu0 0.0
        %2184 = vmatpush1.msra.mxu0 0.0
        %2185 = vmatprep.subr.mxu0 0.0
        %2186 = vmatpush1.msra.mxu0 0.0
        %2187 = vmatprep.subr.mxu0 0.0
        %2188 = vmatpush1.msra.mxu0 0.0
        %2189 = vmatprep.subr.mxu0 0.0
        %2190 = vmatpush1.msra.mxu0 0.0
        %2191 = vmatprep.subr.mxu0 0.0
        %2192 = vmatpush1.msra.mxu0 0.0
        %2193 = vmatprep.subr.mxu0 0.0
        %2194 = vmatpush1.msra.mxu0 0.0
        %2195 = vmatprep.subr.mxu0 0.0
        %2196 = vmatpush1.msra.mxu0 0.0
        %2197 = vmatprep.subr.mxu0 0.0
        %2198 = vmatpush1.msra.mxu0 0.0
        %2199 = vmatprep.subr.mxu0 0.0
        %2200 = vmatpush1.msra.mxu0 0.0
        %2201 = vmatprep.subr.mxu0 0.0
        %2202 = vmatpush1.msra.mxu0 0.0
        %2203 = vmatprep.subr.mxu0 0.0
        %2204 = vmatpush1.msra.mxu0 0.0
        %2205 = vmatprep.subr.mxu0 0.0
        %2206 = vmatpush1.msra.mxu0 0.0
        %2207 = vmatprep.subr.mxu0 0.0
        %2208 = vmatpush1.msra.mxu0 0.0
        %2209 = vmatprep.subr.mxu0 0.0
        %2210 = vmatpush1.msra.mxu0 0.0
        %2211 = vmatprep.subr.mxu0 0.0
        %2212 = vmatpush1.msra.mxu0 0.0
        %2213 = vmatprep.subr.mxu0 0.0
        %2214 = vmatpush1.msra.mxu0 0.0
        %2215 = vmatprep.subr.mxu0 0.0
        %2216 = vmatpush1.msra.mxu0 0.0
        %2217 = vmatprep.subr.mxu0 0.0
        %2218 = vmatpush1.msra.mxu0 0.0
        %2219 = vmatprep.subr.mxu0 0.0
        %2220 = vmatpush1.msra.mxu0 0.0
        %2221 = vmatprep.subr.mxu0 0.0
        %2222 = vmatpush1.msra.mxu0 0.0
        %2223 = vmatprep.subr.mxu0 0.0
        %2224 = vmatpush1.msra.mxu0 0.0
        %2225 = vmatprep.subr.mxu0 0.0
        %2226 = vmatpush1.msra.mxu0 0.0
        %2227 = vmatprep.subr.mxu0 0.0
        %2228 = vmatpush1.msra.mxu0 0.0
        %2229 = vmatprep.subr.mxu0 0.0
        %2230 = vmatpush1.msra.mxu0 0.0
        %2231 = vmatprep.subr.mxu0 0.0
        %2232 = vmatpush1.msra.mxu0 0.0
        %2233 = vmatprep.subr.mxu0 0.0
        %2234 = vmatpush1.msra.mxu0 0.0
        %2235 = vmatprep.subr.mxu0 0.0
        %2236 = vmatpush1.msra.mxu0 0.0
        %2237 = vmatprep.subr.mxu0 0.0
        %2238 = vmatpush1.msra.mxu0 0.0
        %2239 = vmatprep.subr.mxu0 0.0
        %2240 = vmatpush1.msra.mxu0 0.0
        %2241 = vmatprep.subr.mxu0 0.0
        %2242 = vmatpush1.msra.mxu0 0.0
        %2243 = vmatprep.subr.mxu0 0.0
        %2244 = vmatpush1.msra.mxu0 0.0
        %2245 = vmatprep.mubr.f32.mxu0 0.0
        %2246 = vmatmul.mubr.f32.gmra.mrb[0].mxu0 %v2179
        %v2247 = vpop.f32.mrb[0].mxu0
        %v2248 = vadd.f32 0.0, %v2247
        %v2249 = vpop.f32.mrb[0].mxu0
        %2250 = vdwg.mxu0
        %v2251 = vadd.f32 %v1775, %v2248
        %v2252 = vld [vmem:[%s5] sm:$0x1]
        %v2253 = vlaneseq
        %v2254 = vshrl.u32 %v2253, 7
        %v2255 = vsub.s32 0, %v2254
        %v2256 = vrot.slane %v2252, %v2255
        %v2257 = vadd.f32 %v2251, %v2256
        %v2258 = vadd.f32 %v345, %v2257
        %v2259 = vld [vmem:[%s5 + $0x1] sm:$0x1]
        %v2260 = vld [vmem:[%s5 + $0x2] sm:$0x1]
        %v2261 = vsel %vm353, %v2258, 0.0
        %2262 = vadd.xlane.f32.xlu0 %v2261
        %v2263 = vpop.xlane.xlu0 %2262
        %v2264 = vrcp.pop 32.0
        %v2265 = vmul.f32 %v2263, %v2264
        %v2266 = vsub.f32 %v2258, %v2265
        %v2267 = vmul.f32 %v2266, %v2266
        %v2268 = vsel %vm353, %v2267, 0.0
        %2269 = vadd.xlane.f32.xlu0 %v2268
        %v2270 = vpop.xlane.xlu0 %2269
        %v2271 = vmul.f32 %v2270, %v2264
        %v2272 = vadd.f32 %v2271, 1e-05
        %v2273 = vrsqrt.pop %v2272
        %v2274 = vmul.f32 %v2266, %v2273
        %v2275 = vlaneseq
        %v2276 = vshrl.u32 %v2275, 7
        %v2277 = vsub.s32 0, %v2276
        %v2278 = vrot.slane %v2259, %v2277
        %v2279 = vmul.f32 %v2274, %v2278
        %v2280 = vlaneseq
        %v2281 = vshrl.u32 %v2280, 7
        %v2282 = vsub.s32 0, %v2281
        %v2283 = vrot.slane %v2260, %v2282
        %v2284 = vadd.f32 %v2279, %v2283
        %v2285 = vld [vmem:[%s6] sm:$0xff]
        %v2286 = vld [vmem:[%s6 + $0x8] sm:$0xff]
        %v2287 = vld [vmem:[%s6 + $0x10] sm:$0xff]
        %v2288 = vld [vmem:[%s6 + $0x18] sm:$0xff]
        %v2289 = vld [vmem:[%s7] sm:$0x1]
        %v2291 = vlaneseq
        %v2292 = vshrl.u32 %v2291, 7
        %v2293 = vsub.s32 0, %v2292
        %v2294 = vrot.slane %v2289, %v2293
        %v2297 = vsel %vm353, %v2284, 0
        %2299 = vmatprep.subr.mxu0 0.0
        %2300 = vmatpush1.msra.mxu0 %v2285
        %2301 = vmatprep.subr.mxu0 0.0
        %2302 = vmatpush1.msra.mxu0 %v2286
        %2303 = vmatprep.subr.mxu0 0.0
        %2304 = vmatpush1.msra.mxu0 %v2287
        %2305 = vmatprep.subr.mxu0 0.0
        %2306 = vmatpush1.msra.mxu0 %v2288
        %2307 = vmatprep.subr.mxu0 0.0
        %2308 = vmatpush1.msra.mxu0 0.0
        %2309 = vmatprep.subr.mxu0 0.0
        %2310 = vmatpush1.msra.mxu0 0.0
        %2311 = vmatprep.subr.mxu0 0.0
        %2312 = vmatpush1.msra.mxu0 0.0
        %2313 = vmatprep.subr.mxu0 0.0
        %2314 = vmatpush1.msra.mxu0 0.0
        %2315 = vmatprep.subr.mxu0 0.0
        %2316 = vmatpush1.msra.mxu0 0.0
        %2317 = vmatprep.subr.mxu0 0.0
        %2318 = vmatpush1.msra.mxu0 0.0
        %2319 = vmatprep.subr.mxu0 0.0
        %2320 = vmatpush1.msra.mxu0 0.0
        %2321 = vmatprep.subr.mxu0 0.0
        %2322 = vmatpush1.msra.mxu0 0.0
        %2323 = vmatprep.subr.mxu0 0.0
        %2324 = vmatpush1.msra.mxu0 0.0
        %2325 = vmatprep.subr.mxu0 0.0
        %2326 = vmatpush1.msra.mxu0 0.0
        %2327 = vmatprep.subr.mxu0 0.0
        %2328 = vmatpush1.msra.mxu0 0.0
        %2329 = vmatprep.subr.mxu0 0.0
        %2330 = vmatpush1.msra.mxu0 0.0
        %2331 = vmatprep.subr.mxu0 0.0
        %2332 = vmatpush1.msra.mxu0 0.0
        %2333 = vmatprep.subr.mxu0 0.0
        %2334 = vmatpush1.msra.mxu0 0.0
        %2335 = vmatprep.subr.mxu0 0.0
        %2336 = vmatpush1.msra.mxu0 0.0
        %2337 = vmatprep.subr.mxu0 0.0
        %2338 = vmatpush1.msra.mxu0 0.0
        %2339 = vmatprep.subr.mxu0 0.0
        %2340 = vmatpush1.msra.mxu0 0.0
        %2341 = vmatprep.subr.mxu0 0.0
        %2342 = vmatpush1.msra.mxu0 0.0
        %2343 = vmatprep.subr.mxu0 0.0
        %2344 = vmatpush1.msra.mxu0 0.0
        %2345 = vmatprep.subr.mxu0 0.0
        %2346 = vmatpush1.msra.mxu0 0.0
        %2347 = vmatprep.subr.mxu0 0.0
        %2348 = vmatpush1.msra.mxu0 0.0
        %2349 = vmatprep.subr.mxu0 0.0
        %2350 = vmatpush1.msra.mxu0 0.0
        %2351 = vmatprep.subr.mxu0 0.0
        %2352 = vmatpush1.msra.mxu0 0.0
        %2353 = vmatprep.subr.mxu0 0.0
        %2354 = vmatpush1.msra.mxu0 0.0
        %2355 = vmatprep.subr.mxu0 0.0
        %2356 = vmatpush1.msra.mxu0 0.0
        %2357 = vmatprep.subr.mxu0 0.0
        %2358 = vmatpush1.msra.mxu0 0.0
        %2359 = vmatprep.subr.mxu0 0.0
        %2360 = vmatpush1.msra.mxu0 0.0
        %2361 = vmatprep.subr.mxu0 0.0
        %2362 = vmatpush1.msra.mxu0 0.0
        %2363 = vmatprep.mubr.f32.mxu0 0.0
        %2364 = vmatmul.mubr.f32.gmra.mrb[0].mxu0 %v2297
        %v2365 = vpop.f32.mrb[0].mxu0
        %v2366 = vadd.f32 %v2294, %v2365
        %v2367 = vpop.f32.mrb[0].mxu0
        %2368 = vdwg.mxu0
        %v2369 = vmax.f32 %v2366, 0.0
        %v2370 = vld [vmem:[%s8] sm:$0xff]
        %v2371 = vld [vmem:[%s8 + $0x8] sm:$0xff]
        %v2372 = vld [vmem:[%s8 + $0x10] sm:$0xff]
        %v2373 = vld [vmem:[%s8 + $0x18] sm:$0xff]
        %v2374 = vld [vmem:[%s8 + $0x20] sm:$0xff]
        %v2375 = vld [vmem:[%s8 + $0x28] sm:$0xff]
        %v2376 = vld [vmem:[%s8 + $0x30] sm:$0xff]
        %v2377 = vld [vmem:[%s8 + $0x38] sm:$0xff]
        %v2378 = vld [vmem:[%s5 + $0x5] sm:$0x1]
        %v2379 = vlaneseq
        %v2380 = vshrl.u32 %v2379, 7
        %v2381 = vsub.s32 0, %v2380
        %v2382 = vrot.slane %v2378, %v2381
        %vm2383 = vcmask 523264
        %v2385 = vsel %vm2383, %v2369, 0
        %2387 = vmatprep.subr.mxu0 0.0
        %2388 = vmatpush1.msra.mxu0 %v2370
        %2389 = vmatprep.subr.mxu0 0.0
        %2390 = vmatpush1.msra.mxu0 %v2371
        %2391 = vmatprep.subr.mxu0 0.0
        %2392 = vmatpush1.msra.mxu0 %v2372
        %2393 = vmatprep.subr.mxu0 0.0
        %2394 = vmatpush1.msra.mxu0 %v2373
        %2395 = vmatprep.subr.mxu0 0.0
        %2396 = vmatpush1.msra.mxu0 %v2374
        %2397 = vmatprep.subr.mxu0 0.0
        %2398 = vmatpush1.msra.mxu0 %v2375
        %2399 = vmatprep.subr.mxu0 0.0
        %2400 = vmatpush1.msra.mxu0 %v2376
        %2401 = vmatprep.subr.mxu0 0.0
        %2402 = vmatpush1.msra.mxu0 %v2377
        %2403 = vmatprep.subr.mxu0 0.0
        %2404 = vmatpush1.msra.mxu0 0.0
        %2405 = vmatprep.subr.mxu0 0.0
        %2406 = vmatpush1.msra.mxu0 0.0
        %2407 = vmatprep.subr.mxu0 0.0
        %2408 = vmatpush1.msra.mxu0 0.0
        %2409 = vmatprep.subr.mxu0 0.0
        %2410 = vmatpush1.msra.mxu0 0.0
        %2411 = vmatprep.subr.mxu0 0.0
        %2412 = vmatpush1.msra.mxu0 0.0
        %2413 = vmatprep.subr.mxu0 0.0
        %2414 = vmatpush1.msra.mxu0 0.0
        %2415 = vmatprep.subr.mxu0 0.0
        %2416 = vmatpush1.msra.mxu0 0.0
        %2417 = vmatprep.subr.mxu0 0.0
        %2418 = vmatpush1.msra.mxu0 0.0
        %2419 = vmatprep.subr.mxu0 0.0
        %2420 = vmatpush1.msra.mxu0 0.0
        %2421 = vmatprep.subr.mxu0 0.0
        %2422 = vmatpush1.msra.mxu0 0.0
        %2423 = vmatprep.subr.mxu0 0.0
        %2424 = vmatpush1.msra.mxu0 0.0
        %2425 = vmatprep.subr.mxu0 0.0
        %2426 = vmatpush1.msra.mxu0 0.0
        %2427 = vmatprep.subr.mxu0 0.0
        %2428 = vmatpush1.msra.mxu0 0.0
        %2429 = vmatprep.subr.mxu0 0.0
        %2430 = vmatpush1.msra.mxu0 0.0
        %2431 = vmatprep.subr.mxu0 0.0
        %2432 = vmatpush1.msra.mxu0 0.0
        %2433 = vmatprep.subr.mxu0 0.0
        %2434 = vmatpush1.msra.mxu0 0.0
        %2435 = vmatprep.subr.mxu0 0.0
        %2436 = vmatpush1.msra.mxu0 0.0
        %2437 = vmatprep.subr.mxu0 0.0
        %2438 = vmatpush1.msra.mxu0 0.0
        %2439 = vmatprep.subr.mxu0 0.0
        %2440 = vmatpush1.msra.mxu0 0.0
        %2441 = vmatprep.subr.mxu0 0.0
        %2442 = vmatpush1.msra.mxu0 0.0
        %2443 = vmatprep.subr.mxu0 0.0
        %2444 = vmatpush1.msra.mxu0 0.0
        %2445 = vmatprep.subr.mxu0 0.0
        %2446 = vmatpush1.msra.mxu0 0.0
        %2447 = vmatprep.subr.mxu0 0.0
        %2448 = vmatpush1.msra.mxu0 0.0
        %2449 = vmatprep.subr.mxu0 0.0
        %2450 = vmatpush1.msra.mxu0 0.0
        %2451 = vmatprep.mubr.f32.mxu0 0.0
        %2452 = vmatmul.mubr.f32.gmra.mrb[0].mxu0 %v2385
        %v2453 = vpop.f32.mrb[0].mxu0
        %v2454 = vadd.f32 %v2382, %v2453
        %v2455 = vpop.f32.mrb[0].mxu0
        %2456 = vdwg.mxu0
        %v2457 = vadd.f32 %v2284, %v2454
        %v2458 = vld [vmem:[%s5 + $0x3] sm:$0x1]
        %v2459 = vld [vmem:[%s5 + $0x4] sm:$0x1]
        %v2460 = vsel %vm353, %v2457, 0.0
        %2461 = vadd.xlane.f32.xlu0 %v2460
        %v2462 = vpop.xlane.xlu0 %2461
        %v2463 = vmul.f32 %v2462, %v2264
        %v2464 = vsub.f32 %v2457, %v2463
        %v2465 = vmul.f32 %v2464, %v2464
        %v2466 = vsel %vm353, %v2465, 0.0
        %2467 = vadd.xlane.f32.xlu0 %v2466
        %v2468 = vpop.xlane.xlu0 %2467
        %v2469 = vmul.f32 %v2468, %v2264
        %v2470 = vadd.f32 %v2469, 1e-05
        %v2471 = vrsqrt.pop %v2470
        %v2472 = vmul.f32 %v2464, %v2471
        %v2473 = vlaneseq
        %v2474 = vshrl.u32 %v2473, 7
        %v2475 = vsub.s32 0, %v2474
        %v2476 = vrot.slane %v2458, %v2475
        %v2477 = vmul.f32 %v2472, %v2476
        %v2478 = vlaneseq
        %v2479 = vshrl.u32 %v2478, 7
        %v2480 = vsub.s32 0, %v2479
        %v2481 = vrot.slane %v2459, %v2480
        %v2482 = vadd.f32 %v2477, %v2481
        %2483 = vst.msk [vmem:[%s336] sm:$0xff] %vm353, %v2482
        %s2484 = sand.u32 %s230, 1
        %s2485 = scalar_lea.sflag [#allocation3], %s2484
        %s2486 = sand.u32 %s230, 1
        %s2487 = smul.addr %s2486, 8
        %s2488 = scalar_lea.vmem [#allocation2], %s2487
        // Predicated region
        $region57: #{encoder_layer.1} parent=55 // pred_check
          %p2489 = pneg %p240
        $region58: #{encoder_layer.1} parent=55 // pred_check_branch
          %2491 = sbr.rel (%p2489) target = $region60
        $region59: #{encoder_layer.1} parent=55 // pred_region
          %s2493 = ssub.s32 128, 128
          %2494 = vsyncadd %s2485, %s2493
          %s2495 = smul.addr %s23, 128
          %s2496 = scalar_lea.hbm %s9, %s2495
          %s2498 = sshll.u32 %s2488, 4
          %s2499 = int_to_ptr.vmem [resolvable:$true] %s2498
          %2501 = dma.vmem_to_hbm [thread:$0]  %s2499, 128, %s2496, %s2485
        $region60: #{encoder_layer.1} parent=55 // pred_fallthru
          _
      $region56: #{encoder_layer.1} parent=5 // pred_fallthru
        _
      %p2502 = scmp.le.s32.totalorder 2, %s18
      // Predicated region
      $region61: #{encoder_layer.1} parent=5 // pred_check
        %p2503 = pneg %p2502
      $region62: #{encoder_layer.1} parent=5 // pred_check_branch
        %2505 = sbr.rel (%p2503) target = $region64
      $region63: #{encoder_layer.1} parent=5 // pred_region
        %s2506 = ssub.s32 %s18, 2
        // Predicated region
        $region65: #{encoder_layer.1} parent=63 // pred_check
          %p2507 = pneg %p246
        $region66: #{encoder_layer.1} parent=63 // pred_check_branch
          %2509 = sbr.rel (%p2507) target = $region68
        $region67: #{encoder_layer.1} parent=63 // pred_region
          %s2510 = sand.u32 %s231, 1
          %s2511 = scalar_lea.sflag [#allocation3], %s2510
          %s2512 = sand.u32 %s231, 1
          %s2513 = smul.addr %s2512, 8
          %s2514 = scalar_lea.vmem [#allocation2], %s2513
          %2515 = dma.done %s2511, 128
        $region68: #{encoder_layer.1} parent=63 // pred_fallthru
          _
      $region64: #{encoder_layer.1} parent=5 // pred_fallthru
        _
    $region6: #{encoder_layer.1} parent=1 // loop_footer
      %s22 = sadd.s32 1, %s18
    $region7: #{encoder_layer.1} parent=1 // loop_footer_branch
      %17 = sbr.rel target = $region3
    $region8: #{encoder_layer.1} parent=1 // loop_exit
      _
    %2516 = vsyncpa [#allocation3], 1
    %s2517 = scalar_lea.sflag [#allocation3], 1
    %2518 = vsyncpa %s2517, 1

</llo_original>
